<compile_context>
chip_gen: v5e
topology: v5e:2x2
jax: 0.10.0
libtpu: 0.0.40
codegen_flags: <defaults>
</compile_context>

<pallas_src>
import functools

import jax
import jax.numpy as jnp
from jax.experimental import pallas as pl
from jax.experimental.pallas import tpu as pltpu

# ---- synthetic "BART" config (small) ----------------------------------------
VOCAB = 128
D_MODEL = 32
N_HEADS = 2
HEAD_DIM = D_MODEL // N_HEADS
FFN = 64
MAX_POS = 64
ENC_LAYERS = 1
DEC_LAYERS = 1
PAD_TOKEN_ID = 1
DECODER_START_TOKEN_ID = 2
LN_EPS = 1e-5
NEG_INF = -1e9

# MXU operand dtype (accumulation stays f32 via preferred_element_type).
MXU_DTYPE = jnp.bfloat16

# ---- packed small-vector slab row layout (each row padded to 128 lanes) -----
(ROW_ENC_LNE_G, ROW_ENC_LNE_B, ROW_DEC_LNE_G, ROW_DEC_LNE_B,
 ROW_E_BQ, ROW_E_BKV, ROW_E_BO, ROW_E_LN1_G, ROW_E_LN1_B,
 ROW_E_FC1B, ROW_E_FC2B, ROW_E_LN2_G, ROW_E_LN2_B,
 ROW_D_SBQ, ROW_D_SBKV, ROW_D_SBO, ROW_D_LN1_G, ROW_D_LN1_B,
 ROW_D_XBQ, ROW_D_XBKV, ROW_D_XBO, ROW_D_LN2_G, ROW_D_LN2_B,
 ROW_D_FC1B, ROW_D_FC2B, ROW_D_LN3_G, ROW_D_LN3_B,
 ROW_LOGIT_BIAS, N_VEC_ROWS) = range(29)
VEC_SLAB_ROWS = ((N_VEC_ROWS + 7) // 8) * 8      # pad sublanes to multiple of 8


# ============================ in-kernel helpers ===============================

def _mm(a, b):
    """a @ b on the MXU: bf16 operands, f32 accumulation."""
    return jnp.dot(a.astype(MXU_DTYPE), b.astype(MXU_DTYPE),
                   preferred_element_type=jnp.float32)


def _mm_t(a, b):
    """a @ b.T (contract last dims) on the MXU: bf16 operands, f32 accumulation."""
    return jax.lax.dot_general(a.astype(MXU_DTYPE), b.astype(MXU_DTYPE),
                               (((1,), (1,)), ((), ())),
                               preferred_element_type=jnp.float32)


def _ln(x, g, b):
    """LayerNorm of [N, D] with [1, D] gamma/beta (f32 VPU math)."""
    mean = jnp.mean(x, axis=-1, keepdims=True)
    var = jnp.mean(jnp.square(x - mean), axis=-1, keepdims=True)
    return (x - mean) * jax.lax.rsqrt(var + LN_EPS) * g + b


def _embed(ids_col, emb, pos, g, b):
    """Token embedding via one-hot matmul (kept f32 -> exact gather) + pos + LN."""
    n = ids_col.shape[0]
    v = emb.shape[0]
    onehot = (jax.lax.broadcasted_iota(jnp.int32, (n, v), 1) == ids_col).astype(jnp.float32)
    tok = jnp.dot(onehot, emb, preferred_element_type=jnp.float32)    # [N, D]
    return _ln(tok + pos, g, b)


def _token_grids(nq, sq, nk, sk, batch):
    """Block-diagonal same-batch mask for the flattened-[B*S] layout.
       Built from static-unrolled iota compares (no integer division)."""
    tq = jax.lax.broadcasted_iota(jnp.int32, (nq, nk), 0)
    tk = jax.lax.broadcasted_iota(jnp.int32, (nq, nk), 1)
    same = None
    for bb in range(batch):
        mb = ((tq >= bb * sq) & (tq < (bb + 1) * sq) &
              (tk >= bb * sk) & (tk < (bb + 1) * sk))
        same = mb if same is None else (same | mb)
    return same, tq, tk


def _attn(hq, hkv, wq, bq, wkv, bkv, wo, bo, allow):
    """Multi-head SDPA + out-projection (no residual/LN).  allow: [Nq, Nk] bool."""
    _, d = hq.shape
    q = _mm(hq, wq) + bq                               # [Nq, D]
    kv = _mm(hkv, wkv) + bkv                           # [Nk, 2D]
    add_mask = jnp.where(allow, 0.0, NEG_INF)          # single select (no -2e9 sums)
    out = None
    for hd in range(N_HEADS):                          # static unroll (N_HEADS=2)
        lo = hd * HEAD_DIM
        qh = q[:, lo:lo + HEAD_DIM]
        kh = kv[:, lo:lo + HEAD_DIM]
        vh = kv[:, d + lo:d + lo + HEAD_DIM]
        s = _mm_t(qh, kh) * (HEAD_DIM ** -0.5) + add_mask
        s = s - jnp.max(s, axis=-1, keepdims=True)
        p = jnp.exp(s)
        p = p * pl.reciprocal(jnp.sum(p, axis=-1, keepdims=True), approx=True)
        ctx = _mm(p, vh)                               # [Nq, Dh]
        # fold the head-concat into the out-projection: sum_h ctx_h @ Wo[h]
        contrib = _mm(ctx, wo[lo:lo + HEAD_DIM, :])
        out = contrib if out is None else out + contrib
    return out + bo


def _ffn(h, w1, b1, w2, b2):
    # TODO(synk): HF BART uses exact erf GELU; tanh approximation differs by ~1e-3.
    x = jax.nn.gelu(_mm(h, w1) + b1, approximate=True)
    return _mm(x, w2) + b2


# ============================ fused forward kernel ============================

def _bart_fwd_kernel(
        enc_ids_ref, dec_ids_ref, lbl_ref, enc_kmask_ref,
        emb_ref, enc_pos_ref, dec_pos_ref, vecs_ref,
        e_wq_ref, e_wkv_ref, e_wo_ref, e_fc1_ref, e_fc2_ref,
        d_swq_ref, d_swkv_ref, d_swo_ref,
        d_xwq_ref, d_xwkv_ref, d_xwo_ref,
        d_fc1_ref, d_fc2_ref,
        logits_ref, loss_ref,
        *, B, S_enc, S_dec):
    ne = B * S_enc
    nd = B * S_dec
    d = D_MODEL

    vecs = vecs_ref[...]                               # [32, 128] packed vectors

    def vrow(i, n=D_MODEL):
        return vecs[i:i + 1, :n]                       # [1, n] static slice

    emb = emb_ref[...]                                 # [V, D]

    # ------------------------------- encoder ---------------------------------
    h = _embed(enc_ids_ref[...], emb, enc_pos_ref[...],
               vrow(ROW_ENC_LNE_G), vrow(ROW_ENC_LNE_B))

    enc_key_valid = enc_kmask_ref[...] > 0.5           # [1, Ne]
    same_ee, _, _ = _token_grids(ne, S_enc, ne, S_enc, B)
    enc_allow = same_ee & enc_key_valid                # [Ne, Ne]

    a = _attn(h, h, e_wq_ref[...], vrow(ROW_E_BQ),
              e_wkv_ref[...], vrow(ROW_E_BKV, 2 * d),
              e_wo_ref[...], vrow(ROW_E_BO), enc_allow)
    h = _ln(a + h, vrow(ROW_E_LN1_G), vrow(ROW_E_LN1_B))
    f = _ffn(h, e_fc1_ref[...], vrow(ROW_E_FC1B, FFN),
             e_fc2_ref[...], vrow(ROW_E_FC2B))
    enc_h = _ln(f + h, vrow(ROW_E_LN2_G), vrow(ROW_E_LN2_B))

    # ------------------------------- decoder ---------------------------------
    h = _embed(dec_ids_ref[...], emb, dec_pos_ref[...],
               vrow(ROW_DEC_LNE_G), vrow(ROW_DEC_LNE_B))

    same_dd, tq_dd, tk_dd = _token_grids(nd, S_dec, nd, S_dec, B)
    dec_self_allow = same_dd & (tq_dd >= tk_dd)        # causal within each batch row
    a = _attn(h, h, d_swq_ref[...], vrow(ROW_D_SBQ),
              d_swkv_ref[...], vrow(ROW_D_SBKV, 2 * d),
              d_swo_ref[...], vrow(ROW_D_SBO), dec_self_allow)
    h = _ln(a + h, vrow(ROW_D_LN1_G), vrow(ROW_D_LN1_B))

    same_de, _, _ = _token_grids(nd, S_dec, ne, S_enc, B)
    cross_allow = same_de & enc_key_valid              # [Nd, Ne]
    a = _attn(h, enc_h, d_xwq_ref[...], vrow(ROW_D_XBQ),
              d_xwkv_ref[...], vrow(ROW_D_XBKV, 2 * d),
              d_xwo_ref[...], vrow(ROW_D_XBO), cross_allow)
    h = _ln(a + h, vrow(ROW_D_LN2_G), vrow(ROW_D_LN2_B))

    f = _ffn(h, d_fc1_ref[...], vrow(ROW_D_FC1B, FFN),
             d_fc2_ref[...], vrow(ROW_D_FC2B))
    h = _ln(f + h, vrow(ROW_D_LN3_G), vrow(ROW_D_LN3_B))

    # ------------- tied LM head + final_logits_bias + cross-entropy ----------
    logits = _mm_t(h, emb) + vrow(ROW_LOGIT_BIAS, VOCAB)        # [Nd, V] lane-dense
    logits_ref[...] = logits

    lbl = lbl_ref[...]                                          # [Nd, 1] int32
    m = jnp.max(logits, axis=-1, keepdims=True)
    lse = m + jnp.log(jnp.sum(jnp.exp(logits - m), axis=-1, keepdims=True))
    iota_v = jax.lax.broadcasted_iota(jnp.int32, (nd, VOCAB), 1)
    picked = jnp.sum(jnp.where(iota_v == lbl, logits, 0.0), axis=-1, keepdims=True)
    valid = lbl != -100
    loss_tok = jnp.where(valid, lse - picked, 0.0)              # [Nd, 1]
    count = jnp.sum(valid.astype(jnp.float32))
    # NOTE: HF returns NaN when every label is -100; the mean here is guarded.
    loss_ref[...] = jnp.sum(loss_tok, keepdims=True) / jnp.maximum(count, 1.0)


# ============================== wrapper (JAX glue) ============================

def shift_tokens_right(labels, pad_id, start_id):
    shifted = jnp.roll(labels, 1, axis=1)
    shifted = shifted.at[:, 0].set(start_id)
    return jnp.where(shifted == -100, pad_id, shifted)


def _pack_vecs(params):
    """Pack all bias / LayerNorm / final_logits_bias vectors into one [32,128] slab."""
    e = params["enc_layers"][0]
    dc = params["dec_layers"][0]
    rows = [
        params["enc_ln_emb"]["g"], params["enc_ln_emb"]["b"],
        params["dec_ln_emb"]["g"], params["dec_ln_emb"]["b"],
        e["self_attn"]["bq"], e["self_attn"]["bkv"], e["self_attn"]["bo"],
        e["ln1"]["g"], e["ln1"]["b"],
        e["fc1_b"], e["fc2_b"], e["ln2"]["g"], e["ln2"]["b"],
        dc["self_attn"]["bq"], dc["self_attn"]["bkv"], dc["self_attn"]["bo"],
        dc["ln1"]["g"], dc["ln1"]["b"],
        dc["cross_attn"]["bq"], dc["cross_attn"]["bkv"], dc["cross_attn"]["bo"],
        dc["ln2"]["g"], dc["ln2"]["b"],
        dc["fc1_b"], dc["fc2_b"], dc["ln3"]["g"], dc["ln3"]["b"],
        params["final_logits_bias"],
    ]
    assert len(rows) == N_VEC_ROWS
    padded = [jnp.pad(r.reshape(1, -1), ((0, 0), (0, 128 - r.shape[-1]))) for r in rows]
    slab = jnp.concatenate(padded, axis=0)
    return jnp.pad(slab, ((0, VEC_SLAB_ROWS - N_VEC_ROWS), (0, 0)))


def music_bart_forward(params, input_ids, attention_mask, labels):
    """Mirrors BartForConditionalGeneration(input_ids, attention_mask, labels)."""
    # TODO(synk): generalize to >1 layer by stacking per-layer weights and looping in-kernel.
    assert ENC_LAYERS == 1 and DEC_LAYERS == 1
    B, S_enc = input_ids.shape
    S_dec = labels.shape[1]
    ne, nd = B * S_enc, B * S_dec

    decoder_input_ids = shift_tokens_right(labels, PAD_TOKEN_ID, DECODER_START_TOKEN_ID)

    enc_ids = input_ids.reshape(ne, 1).astype(jnp.int32)
    dec_ids = decoder_input_ids.reshape(nd, 1).astype(jnp.int32)
    lbl_col = labels.reshape(nd, 1).astype(jnp.int32)
    enc_kmask = attention_mask.reshape(1, ne).astype(jnp.float32)

    enc_pos = jnp.tile(params["enc_pos"][2:2 + S_enc], (B, 1))     # [Ne, D]
    dec_pos = jnp.tile(params["dec_pos"][2:2 + S_dec], (B, 1))     # [Nd, D]
    vec_slab = _pack_vecs(params)

    e = params["enc_layers"][0]
    dc = params["dec_layers"][0]

    operands = (
        enc_ids, dec_ids, lbl_col, enc_kmask,
        params["shared_emb"], enc_pos, dec_pos, vec_slab,
        e["self_attn"]["wq"], e["self_attn"]["wkv"], e["self_attn"]["wo"],
        e["fc1_w"], e["fc2_w"],
        dc["self_attn"]["wq"], dc["self_attn"]["wkv"], dc["self_attn"]["wo"],
        dc["cross_attn"]["wq"], dc["cross_attn"]["wkv"], dc["cross_attn"]["wo"],
        dc["fc1_w"], dc["fc2_w"],
    )
    vmem = pl.BlockSpec(memory_space=pltpu.MemorySpace.VMEM)

    logits_flat, loss = pl.pallas_call(
        functools.partial(_bart_fwd_kernel, B=B, S_enc=S_enc, S_dec=S_dec),
        out_shape=(jax.ShapeDtypeStruct((nd, VOCAB), jnp.float32),
                   jax.ShapeDtypeStruct((1, 1), jnp.float32)),
        in_specs=[vmem] * len(operands),
        out_specs=(vmem, vmem),
    )(*operands)

    return loss[0, 0], logits_flat.reshape(B, S_dec, VOCAB)


# ============================= parameter init =================================

def init_params(key):
    keys = iter(jax.random.split(key, 256))

    def w(*shape):
        return jax.random.normal(next(keys), shape, jnp.float32) * 0.02

    def zeros(n):
        return jnp.zeros((n,), jnp.float32)

    def ln():
        return dict(g=jnp.ones((D_MODEL,), jnp.float32), b=zeros(D_MODEL))

    def attn():
        # k/v projections stored fused ([D, 2D]) so the kernel does one kv matmul
        return dict(wq=w(D_MODEL, D_MODEL), bq=zeros(D_MODEL),
                    wkv=w(D_MODEL, 2 * D_MODEL), bkv=zeros(2 * D_MODEL),
                    wo=w(D_MODEL, D_MODEL), bo=zeros(D_MODEL))

    def enc_layer():
        return dict(self_attn=attn(), ln1=ln(),
                    fc1_w=w(D_MODEL, FFN), fc1_b=zeros(FFN),
                    fc2_w=w(FFN, D_MODEL), fc2_b=zeros(D_MODEL),
                    ln2=ln())

    def dec_layer():
        return dict(self_attn=attn(), ln1=ln(),
                    cross_attn=attn(), ln2=ln(),
                    fc1_w=w(D_MODEL, FFN), fc1_b=zeros(FFN),
                    fc2_w=w(FFN, D_MODEL), fc2_b=zeros(D_MODEL),
                    ln3=ln())

    return dict(
        shared_emb=w(VOCAB, D_MODEL),
        enc_pos=w(MAX_POS + 2, D_MODEL),
        dec_pos=w(MAX_POS + 2, D_MODEL),
        enc_ln_emb=ln(),
        dec_ln_emb=ln(),
        enc_layers=[enc_layer() for _ in range(ENC_LAYERS)],
        dec_layers=[dec_layer() for _ in range(DEC_LAYERS)],
        final_logits_bias=zeros(VOCAB),
    )


# ==================================== main ====================================
# TODO(synk): .generate() (beam search) and the Prompt/Midi tokenizers are host-side
# autoregressive / string logic with no Pallas equivalent; only forward() is kernelized.

if __name__ == "__main__":
    key = jax.random.PRNGKey(0)
    pkey, ikey, lkey = jax.random.split(key, 3)

    params = init_params(pkey)

    B, S = 2, 8
    input_ids = jax.random.randint(ikey, (B, S), 3, VOCAB, dtype=jnp.int32)
    attention_mask = jnp.ones((B, S), jnp.int32).at[1, 6:].set(0)  # pad tail of row 1
    labels = jax.random.randint(lkey, (B, S), 3, VOCAB, dtype=jnp.int32)

    fwd = jax.jit(music_bart_forward)
    loss, logits = fwd(params, input_ids, attention_mask, labels)
    jax.block_until_ready((loss, logits))

    assert logits.shape == (B, S, VOCAB)
    assert loss.shape == ()
    assert bool(jnp.isfinite(loss))
    print("KERNEL_OK")
</pallas_src>

<mosaic_0001>
module attributes {stable_mosaic.version = 11 : i64} {
  func.func @_bart_fwd_kernel(%arg0: memref<16x1xi32, #tpu.memory_space<vmem>>, %arg1: memref<16x1xi32, #tpu.memory_space<vmem>>, %arg2: memref<16x1xi32, #tpu.memory_space<vmem>>, %arg3: memref<1x16xf32, #tpu.memory_space<vmem>>, %arg4: memref<128x32xf32, #tpu.memory_space<vmem>>, %arg5: memref<16x32xf32, #tpu.memory_space<vmem>>, %arg6: memref<16x32xf32, #tpu.memory_space<vmem>>, %arg7: memref<32x128xf32, #tpu.memory_space<vmem>>, %arg8: memref<32x32xf32, #tpu.memory_space<vmem>>, %arg9: memref<32x64xf32, #tpu.memory_space<vmem>>, %arg10: memref<32x32xf32, #tpu.memory_space<vmem>>, %arg11: memref<32x64xf32, #tpu.memory_space<vmem>>, %arg12: memref<64x32xf32, #tpu.memory_space<vmem>>, %arg13: memref<32x32xf32, #tpu.memory_space<vmem>>, %arg14: memref<32x64xf32, #tpu.memory_space<vmem>>, %arg15: memref<32x32xf32, #tpu.memory_space<vmem>>, %arg16: memref<32x32xf32, #tpu.memory_space<vmem>>, %arg17: memref<32x64xf32, #tpu.memory_space<vmem>>, %arg18: memref<32x32xf32, #tpu.memory_space<vmem>>, %arg19: memref<32x64xf32, #tpu.memory_space<vmem>>, %arg20: memref<64x32xf32, #tpu.memory_space<vmem>>, %arg21: memref<16x128xf32, #tpu.memory_space<vmem>>, %arg22: memref<1x1xf32, #tpu.memory_space<vmem>>) attributes {dimension_semantics = [], scalar_prefetch = 0 : i64, scratch_operands = 0 : i64, tpu.core_type = #tpu.core_type<tc>} {
    %c0 = arith.constant 0 : index
    %c0_0 = arith.constant 0 : index
    %0 = vector.load %arg7[%c0, %c0_0] : memref<32x128xf32, #tpu.memory_space<vmem>>, vector<32x128xf32>
    %c0_1 = arith.constant 0 : index
    %c0_2 = arith.constant 0 : index
    %1 = vector.load %arg4[%c0_1, %c0_2] : memref<128x32xf32, #tpu.memory_space<vmem>>, vector<128x32xf32>
    %c0_3 = arith.constant 0 : index
    %c0_4 = arith.constant 0 : index
    %2 = vector.load %arg0[%c0_3, %c0_4] : memref<16x1xi32, #tpu.memory_space<vmem>>, vector<16x1xi32>
    %c0_5 = arith.constant 0 : index
    %c0_6 = arith.constant 0 : index
    %3 = vector.load %arg5[%c0_5, %c0_6] : memref<16x32xf32, #tpu.memory_space<vmem>>, vector<16x32xf32>
    %4 = vector.extract_strided_slice %0 {offsets = [0, 0], sizes = [1, 32], strides = [1, 1]} : vector<32x128xf32> to vector<1x32xf32>
    %5 = vector.extract_strided_slice %0 {offsets = [1, 0], sizes = [1, 32], strides = [1, 1]} : vector<32x128xf32> to vector<1x32xf32>
    %6 = tpu.iota {dimensions = array<i32: 1>} : vector<16x128xi32>
    %7 = vector.broadcast %2 : vector<16x1xi32> to vector<16x128xi32>
    %8 = arith.cmpi eq, %6, %7 : vector<16x128xi32>
    %9 = arith.extui %8 : vector<16x128xi1> to vector<16x128xi32>
    %10 = arith.sitofp %9 : vector<16x128xi32> to vector<16x128xf32>
    %cst = arith.constant dense<0.000000e+00> : vector<16x32xf32>
    %11 = tpu.matmul %10, %1, %cst {dimension_numbers = #tpu.dot_dimension_numbers<[1], [0], [0], [1], [0, 0, 1, 1], [], []>} : vector<16x128xf32>, vector<128x32xf32>, vector<16x32xf32> -> vector<16x32xf32>
    %12 = arith.addf %11, %3 : vector<16x32xf32>
    %cst_7 = arith.constant dense<0.000000e+00> : vector<16xf32>
    %13 = vector.multi_reduction <add>, %12, %cst_7 [1] : vector<16x32xf32> to vector<16xf32>
    %14 = vector.shape_cast %13 : vector<16xf32> to vector<16x1xf32>
    %cst_8 = arith.constant 3.200000e+01 : f32
    %15 = vector.broadcast %cst_8 : f32 to vector<16x1xf32>
    %16 = arith.divf %14, %15 : vector<16x1xf32>
    %17 = vector.broadcast %16 : vector<16x1xf32> to vector<16x32xf32>
    %18 = arith.subf %12, %17 : vector<16x32xf32>
    %19 = arith.mulf %18, %18 : vector<16x32xf32>
    %cst_9 = arith.constant dense<0.000000e+00> : vector<16xf32>
    %20 = vector.multi_reduction <add>, %19, %cst_9 [1] : vector<16x32xf32> to vector<16xf32>
    %21 = vector.shape_cast %20 : vector<16xf32> to vector<16x1xf32>
    %cst_10 = arith.constant 3.200000e+01 : f32
    %22 = vector.broadcast %cst_10 : f32 to vector<16x1xf32>
    %23 = arith.divf %21, %22 : vector<16x1xf32>
    %24 = vector.broadcast %16 : vector<16x1xf32> to vector<16x32xf32>
    %25 = arith.subf %12, %24 : vector<16x32xf32>
    %cst_11 = arith.constant 9.99999974E-6 : f32
    %26 = vector.broadcast %cst_11 : f32 to vector<16x1xf32>
    %27 = arith.addf %23, %26 : vector<16x1xf32>
    %28 = math.rsqrt %27 : vector<16x1xf32>
    %29 = vector.broadcast %28 : vector<16x1xf32> to vector<16x32xf32>
    %30 = arith.mulf %25, %29 : vector<16x32xf32>
    %31 = vector.broadcast %4 : vector<1x32xf32> to vector<16x32xf32>
    %32 = arith.mulf %30, %31 : vector<16x32xf32>
    %33 = vector.broadcast %5 : vector<1x32xf32> to vector<16x32xf32>
    %34 = arith.addf %32, %33 : vector<16x32xf32>
    %c0_12 = arith.constant 0 : index
    %c0_13 = arith.constant 0 : index
    %35 = vector.load %arg3[%c0_12, %c0_13] : memref<1x16xf32, #tpu.memory_space<vmem>>, vector<1x16xf32>
    %cst_14 = arith.constant 5.000000e-01 : f32
    %36 = vector.broadcast %cst_14 : f32 to vector<1x16xf32>
    %37 = arith.cmpf ogt, %35, %36 : vector<1x16xf32>
    %38 = tpu.iota {dimensions = array<i32: 0>} : vector<16x16xi32>
    %39 = tpu.iota {dimensions = array<i32: 1>} : vector<16x16xi32>
    %c0_i32 = arith.constant 0 : i32
    %40 = vector.broadcast %c0_i32 : i32 to vector<16x16xi32>
    %41 = arith.cmpi sge, %38, %40 : vector<16x16xi32>
    %c8_i32 = arith.constant 8 : i32
    %42 = vector.broadcast %c8_i32 : i32 to vector<16x16xi32>
    %43 = arith.cmpi slt, %38, %42 : vector<16x16xi32>
    %44 = arith.andi %41, %43 : vector<16x16xi1>
    %c0_i32_15 = arith.constant 0 : i32
    %45 = vector.broadcast %c0_i32_15 : i32 to vector<16x16xi32>
    %46 = arith.cmpi sge, %39, %45 : vector<16x16xi32>
    %47 = arith.andi %44, %46 : vector<16x16xi1>
    %c8_i32_16 = arith.constant 8 : i32
    %48 = vector.broadcast %c8_i32_16 : i32 to vector<16x16xi32>
    %49 = arith.cmpi slt, %39, %48 : vector<16x16xi32>
    %50 = arith.andi %47, %49 : vector<16x16xi1>
    %c8_i32_17 = arith.constant 8 : i32
    %51 = vector.broadcast %c8_i32_17 : i32 to vector<16x16xi32>
    %52 = arith.cmpi sge, %38, %51 : vector<16x16xi32>
    %c16_i32 = arith.constant 16 : i32
    %53 = vector.broadcast %c16_i32 : i32 to vector<16x16xi32>
    %54 = arith.cmpi slt, %38, %53 : vector<16x16xi32>
    %55 = arith.andi %52, %54 : vector<16x16xi1>
    %c8_i32_18 = arith.constant 8 : i32
    %56 = vector.broadcast %c8_i32_18 : i32 to vector<16x16xi32>
    %57 = arith.cmpi sge, %39, %56 : vector<16x16xi32>
    %58 = arith.andi %55, %57 : vector<16x16xi1>
    %c16_i32_19 = arith.constant 16 : i32
    %59 = vector.broadcast %c16_i32_19 : i32 to vector<16x16xi32>
    %60 = arith.cmpi slt, %39, %59 : vector<16x16xi32>
    %61 = arith.andi %58, %60 : vector<16x16xi1>
    %62 = arith.ori %50, %61 : vector<16x16xi1>
    %63 = vector.broadcast %37 : vector<1x16xi1> to vector<16x16xi1>
    %64 = arith.andi %62, %63 : vector<16x16xi1>
    %c0_20 = arith.constant 0 : index
    %c0_21 = arith.constant 0 : index
    %65 = vector.load %arg8[%c0_20, %c0_21] : memref<32x32xf32, #tpu.memory_space<vmem>>, vector<32x32xf32>
    %66 = vector.extract_strided_slice %0 {offsets = [4, 0], sizes = [1, 32], strides = [1, 1]} : vector<32x128xf32> to vector<1x32xf32>
    %c0_22 = arith.constant 0 : index
    %c0_23 = arith.constant 0 : index
    %67 = vector.load %arg9[%c0_22, %c0_23] : memref<32x64xf32, #tpu.memory_space<vmem>>, vector<32x64xf32>
    %68 = vector.extract_strided_slice %0 {offsets = [5, 0], sizes = [1, 64], strides = [1, 1]} : vector<32x128xf32> to vector<1x64xf32>
    %c0_24 = arith.constant 0 : index
    %c0_25 = arith.constant 0 : index
    %69 = vector.load %arg10[%c0_24, %c0_25] : memref<32x32xf32, #tpu.memory_space<vmem>>, vector<32x32xf32>
    %70 = vector.extract_strided_slice %0 {offsets = [6, 0], sizes = [1, 32], strides = [1, 1]} : vector<32x128xf32> to vector<1x32xf32>
    %71 = arith.truncf %34 : vector<16x32xf32> to vector<16x32xbf16>
    %72 = arith.truncf %65 : vector<32x32xf32> to vector<32x32xbf16>
    %cst_26 = arith.constant dense<0.000000e+00> : vector<16x32xf32>
    %73 = tpu.matmul %71, %72, %cst_26 {dimension_numbers = #tpu.dot_dimension_numbers<[1], [0], [0], [1], [0, 0, 1, 1], [], []>} : vector<16x32xbf16>, vector<32x32xbf16>, vector<16x32xf32> -> vector<16x32xf32>
    %74 = vector.broadcast %66 : vector<1x32xf32> to vector<16x32xf32>
    %75 = arith.addf %73, %74 : vector<16x32xf32>
    %76 = arith.truncf %34 : vector<16x32xf32> to vector<16x32xbf16>
    %77 = arith.truncf %67 : vector<32x64xf32> to vector<32x64xbf16>
    %cst_27 = arith.constant dense<0.000000e+00> : vector<16x64xf32>
    %78 = tpu.matmul %76, %77, %cst_27 {dimension_numbers = #tpu.dot_dimension_numbers<[1], [0], [0], [1], [0, 0, 1, 1], [], []>} : vector<16x32xbf16>, vector<32x64xbf16>, vector<16x64xf32> -> vector<16x64xf32>
    %79 = vector.broadcast %68 : vector<1x64xf32> to vector<16x64xf32>
    %80 = arith.addf %78, %79 : vector<16x64xf32>
    %cst_28 = arith.constant 0.000000e+00 : f32
    %cst_29 = arith.constant -1.000000e+09 : f32
    %81 = vector.broadcast %cst_28 : f32 to vector<16x16xf32>
    %82 = vector.broadcast %cst_29 : f32 to vector<16x16xf32>
    %83 = arith.select %64, %81, %82 : vector<16x16xi1>, vector<16x16xf32>
    %84 = vector.extract_strided_slice %75 {offsets = [0, 0], sizes = [16, 16], strides = [1, 1]} : vector<16x32xf32> to vector<16x16xf32>
    %85 = vector.extract_strided_slice %80 {offsets = [0, 0], sizes = [16, 16], strides = [1, 1]} : vector<16x64xf32> to vector<16x16xf32>
    %86 = vector.extract_strided_slice %80 {offsets = [0, 32], sizes = [16, 16], strides = [1, 1]} : vector<16x64xf32> to vector<16x16xf32>
    %87 = arith.truncf %84 : vector<16x16xf32> to vector<16x16xbf16>
    %88 = arith.truncf %85 : vector<16x16xf32> to vector<16x16xbf16>
    %cst_30 = arith.constant dense<0.000000e+00> : vector<16x16xf32>
    %89 = tpu.matmul %87, %88, %cst_30 {dimension_numbers = #tpu.dot_dimension_numbers<[1], [1], [0], [0], [0, 0, 1, 0], [], []>} : vector<16x16xbf16>, vector<16x16xbf16>, vector<16x16xf32> -> vector<16x16xf32>
    %cst_31 = arith.constant 2.500000e-01 : f32
    %90 = vector.broadcast %cst_31 : f32 to vector<16x16xf32>
    %91 = arith.mulf %89, %90 : vector<16x16xf32>
    %92 = arith.addf %91, %83 : vector<16x16xf32>
    %cst_32 = arith.constant dense<0xFF800000> : vector<16xf32>
    %93 = vector.multi_reduction <maximumf>, %92, %cst_32 [1] : vector<16x16xf32> to vector<16xf32>
    %94 = vector.shape_cast %93 : vector<16xf32> to vector<16x1xf32>
    %95 = vector.broadcast %94 : vector<16x1xf32> to vector<16x16xf32>
    %96 = arith.subf %92, %95 : vector<16x16xf32>
    %97 = math.exp %96 : vector<16x16xf32>
    %cst_33 = arith.constant dense<0.000000e+00> : vector<16xf32>
    %98 = vector.multi_reduction <add>, %97, %cst_33 [1] : vector<16x16xf32> to vector<16xf32>
    %99 = vector.shape_cast %98 : vector<16xf32> to vector<16x1xf32>
    %100 = tpu.reciprocal %99 {approx = true} : vector<16x1xf32> -> vector<16x1xf32>
    %101 = vector.broadcast %100 : vector<16x1xf32> to vector<16x16xf32>
    %102 = arith.mulf %97, %101 : vector<16x16xf32>
    %103 = arith.truncf %102 : vector<16x16xf32> to vector<16x16xbf16>
    %104 = arith.truncf %86 : vector<16x16xf32> to vector<16x16xbf16>
    %cst_34 = arith.constant dense<0.000000e+00> : vector<16x16xf32>
    %105 = tpu.matmul %103, %104, %cst_34 {dimension_numbers = #tpu.dot_dimension_numbers<[1], [0], [0], [1], [0, 0, 1, 1], [], []>} : vector<16x16xbf16>, vector<16x16xbf16>, vector<16x16xf32> -> vector<16x16xf32>
    %106 = vector.extract_strided_slice %69 {offsets = [0, 0], sizes = [16, 32], strides = [1, 1]} : vector<32x32xf32> to vector<16x32xf32>
    %107 = arith.truncf %105 : vector<16x16xf32> to vector<16x16xbf16>
    %108 = arith.truncf %106 : vector<16x32xf32> to vector<16x32xbf16>
    %cst_35 = arith.constant dense<0.000000e+00> : vector<16x32xf32>
    %109 = tpu.matmul %107, %108, %cst_35 {dimension_numbers = #tpu.dot_dimension_numbers<[1], [0], [0], [1], [0, 0, 1, 1], [], []>} : vector<16x16xbf16>, vector<16x32xbf16>, vector<16x32xf32> -> vector<16x32xf32>
    %110 = vector.extract_strided_slice %75 {offsets = [0, 16], sizes = [16, 16], strides = [1, 1]} : vector<16x32xf32> to vector<16x16xf32>
    %111 = vector.extract_strided_slice %80 {offsets = [0, 16], sizes = [16, 16], strides = [1, 1]} : vector<16x64xf32> to vector<16x16xf32>
    %112 = vector.extract_strided_slice %80 {offsets = [0, 48], sizes = [16, 16], strides = [1, 1]} : vector<16x64xf32> to vector<16x16xf32>
    %113 = arith.truncf %110 : vector<16x16xf32> to vector<16x16xbf16>
    %114 = arith.truncf %111 : vector<16x16xf32> to vector<16x16xbf16>
    %cst_36 = arith.constant dense<0.000000e+00> : vector<16x16xf32>
    %115 = tpu.matmul %113, %114, %cst_36 {dimension_numbers = #tpu.dot_dimension_numbers<[1], [1], [0], [0], [0, 0, 1, 0], [], []>} : vector<16x16xbf16>, vector<16x16xbf16>, vector<16x16xf32> -> vector<16x16xf32>
    %cst_37 = arith.constant 2.500000e-01 : f32
    %116 = vector.broadcast %cst_37 : f32 to vector<16x16xf32>
    %117 = arith.mulf %115, %116 : vector<16x16xf32>
    %118 = arith.addf %117, %83 : vector<16x16xf32>
    %cst_38 = arith.constant dense<0xFF800000> : vector<16xf32>
    %119 = vector.multi_reduction <maximumf>, %118, %cst_38 [1] : vector<16x16xf32> to vector<16xf32>
    %120 = vector.shape_cast %119 : vector<16xf32> to vector<16x1xf32>
    %121 = vector.broadcast %120 : vector<16x1xf32> to vector<16x16xf32>
    %122 = arith.subf %118, %121 : vector<16x16xf32>
    %123 = math.exp %122 : vector<16x16xf32>
    %cst_39 = arith.constant dense<0.000000e+00> : vector<16xf32>
    %124 = vector.multi_reduction <add>, %123, %cst_39 [1] : vector<16x16xf32> to vector<16xf32>
    %125 = vector.shape_cast %124 : vector<16xf32> to vector<16x1xf32>
    %126 = tpu.reciprocal %125 {approx = true} : vector<16x1xf32> -> vector<16x1xf32>
    %127 = vector.broadcast %126 : vector<16x1xf32> to vector<16x16xf32>
    %128 = arith.mulf %123, %127 : vector<16x16xf32>
    %129 = arith.truncf %128 : vector<16x16xf32> to vector<16x16xbf16>
    %130 = arith.truncf %112 : vector<16x16xf32> to vector<16x16xbf16>
    %cst_40 = arith.constant dense<0.000000e+00> : vector<16x16xf32>
    %131 = tpu.matmul %129, %130, %cst_40 {dimension_numbers = #tpu.dot_dimension_numbers<[1], [0], [0], [1], [0, 0, 1, 1], [], []>} : vector<16x16xbf16>, vector<16x16xbf16>, vector<16x16xf32> -> vector<16x16xf32>
    %132 = vector.extract_strided_slice %69 {offsets = [16, 0], sizes = [16, 32], strides = [1, 1]} : vector<32x32xf32> to vector<16x32xf32>
    %133 = arith.truncf %131 : vector<16x16xf32> to vector<16x16xbf16>
    %134 = arith.truncf %132 : vector<16x32xf32> to vector<16x32xbf16>
    %cst_41 = arith.constant dense<0.000000e+00> : vector<16x32xf32>
    %135 = tpu.matmul %133, %134, %cst_41 {dimension_numbers = #tpu.dot_dimension_numbers<[1], [0], [0], [1], [0, 0, 1, 1], [], []>} : vector<16x16xbf16>, vector<16x32xbf16>, vector<16x32xf32> -> vector<16x32xf32>
    %136 = arith.addf %109, %135 : vector<16x32xf32>
    %137 = vector.broadcast %70 : vector<1x32xf32> to vector<16x32xf32>
    %138 = arith.addf %136, %137 : vector<16x32xf32>
    %139 = arith.addf %138, %34 : vector<16x32xf32>
    %140 = vector.extract_strided_slice %0 {offsets = [7, 0], sizes = [1, 32], strides = [1, 1]} : vector<32x128xf32> to vector<1x32xf32>
    %141 = vector.extract_strided_slice %0 {offsets = [8, 0], sizes = [1, 32], strides = [1, 1]} : vector<32x128xf32> to vector<1x32xf32>
    %cst_42 = arith.constant dense<0.000000e+00> : vector<16xf32>
    %142 = vector.multi_reduction <add>, %139, %cst_42 [1] : vector<16x32xf32> to vector<16xf32>
    %143 = vector.shape_cast %142 : vector<16xf32> to vector<16x1xf32>
    %cst_43 = arith.constant 3.200000e+01 : f32
    %144 = vector.broadcast %cst_43 : f32 to vector<16x1xf32>
    %145 = arith.divf %143, %144 : vector<16x1xf32>
    %146 = vector.broadcast %145 : vector<16x1xf32> to vector<16x32xf32>
    %147 = arith.subf %139, %146 : vector<16x32xf32>
    %148 = arith.mulf %147, %147 : vector<16x32xf32>
    %cst_44 = arith.constant dense<0.000000e+00> : vector<16xf32>
    %149 = vector.multi_reduction <add>, %148, %cst_44 [1] : vector<16x32xf32> to vector<16xf32>
    %150 = vector.shape_cast %149 : vector<16xf32> to vector<16x1xf32>
    %cst_45 = arith.constant 3.200000e+01 : f32
    %151 = vector.broadcast %cst_45 : f32 to vector<16x1xf32>
    %152 = arith.divf %150, %151 : vector<16x1xf32>
    %153 = vector.broadcast %145 : vector<16x1xf32> to vector<16x32xf32>
    %154 = arith.subf %139, %153 : vector<16x32xf32>
    %cst_46 = arith.constant 9.99999974E-6 : f32
    %155 = vector.broadcast %cst_46 : f32 to vector<16x1xf32>
    %156 = arith.addf %152, %155 : vector<16x1xf32>
    %157 = math.rsqrt %156 : vector<16x1xf32>
    %158 = vector.broadcast %157 : vector<16x1xf32> to vector<16x32xf32>
    %159 = arith.mulf %154, %158 : vector<16x32xf32>
    %160 = vector.broadcast %140 : vector<1x32xf32> to vector<16x32xf32>
    %161 = arith.mulf %159, %160 : vector<16x32xf32>
    %162 = vector.broadcast %141 : vector<1x32xf32> to vector<16x32xf32>
    %163 = arith.addf %161, %162 : vector<16x32xf32>
    %c0_47 = arith.constant 0 : index
    %c0_48 = arith.constant 0 : index
    %164 = vector.load %arg11[%c0_47, %c0_48] : memref<32x64xf32, #tpu.memory_space<vmem>>, vector<32x64xf32>
    %165 = vector.extract_strided_slice %0 {offsets = [9, 0], sizes = [1, 64], strides = [1, 1]} : vector<32x128xf32> to vector<1x64xf32>
    %c0_49 = arith.constant 0 : index
    %c0_50 = arith.constant 0 : index
    %166 = vector.load %arg12[%c0_49, %c0_50] : memref<64x32xf32, #tpu.memory_space<vmem>>, vector<64x32xf32>
    %167 = vector.extract_strided_slice %0 {offsets = [10, 0], sizes = [1, 32], strides = [1, 1]} : vector<32x128xf32> to vector<1x32xf32>
    %168 = arith.truncf %163 : vector<16x32xf32> to vector<16x32xbf16>
    %169 = arith.truncf %164 : vector<32x64xf32> to vector<32x64xbf16>
    %cst_51 = arith.constant dense<0.000000e+00> : vector<16x64xf32>
    %170 = tpu.matmul %168, %169, %cst_51 {dimension_numbers = #tpu.dot_dimension_numbers<[1], [0], [0], [1], [0, 0, 1, 1], [], []>} : vector<16x32xbf16>, vector<32x64xbf16>, vector<16x64xf32> -> vector<16x64xf32>
    %171 = vector.broadcast %165 : vector<1x64xf32> to vector<16x64xf32>
    %172 = arith.addf %170, %171 : vector<16x64xf32>
    %173 = arith.mulf %172, %172 : vector<16x64xf32>
    %174 = arith.mulf %172, %173 : vector<16x64xf32>
    %cst_52 = arith.constant 4.471500e-02 : f32
    %175 = vector.broadcast %cst_52 : f32 to vector<16x64xf32>
    %176 = arith.mulf %175, %174 : vector<16x64xf32>
    %177 = arith.addf %172, %176 : vector<16x64xf32>
    %cst_53 = arith.constant 0.797884583 : f32
    %178 = vector.broadcast %cst_53 : f32 to vector<16x64xf32>
    %179 = arith.mulf %178, %177 : vector<16x64xf32>
    %180 = math.tanh %179 : vector<16x64xf32>
    %cst_54 = arith.constant 1.000000e+00 : f32
    %181 = vector.broadcast %cst_54 : f32 to vector<16x64xf32>
    %182 = arith.addf %181, %180 : vector<16x64xf32>
    %cst_55 = arith.constant 5.000000e-01 : f32
    %183 = vector.broadcast %cst_55 : f32 to vector<16x64xf32>
    %184 = arith.mulf %183, %182 : vector<16x64xf32>
    %185 = arith.mulf %172, %184 : vector<16x64xf32>
    %186 = arith.truncf %185 : vector<16x64xf32> to vector<16x64xbf16>
    %187 = arith.truncf %166 : vector<64x32xf32> to vector<64x32xbf16>
    %cst_56 = arith.constant dense<0.000000e+00> : vector<16x32xf32>
    %188 = tpu.matmul %186, %187, %cst_56 {dimension_numbers = #tpu.dot_dimension_numbers<[1], [0], [0], [1], [0, 0, 1, 1], [], []>} : vector<16x64xbf16>, vector<64x32xbf16>, vector<16x32xf32> -> vector<16x32xf32>
    %189 = vector.broadcast %167 : vector<1x32xf32> to vector<16x32xf32>
    %190 = arith.addf %188, %189 : vector<16x32xf32>
    %191 = arith.addf %190, %163 : vector<16x32xf32>
    %192 = vector.extract_strided_slice %0 {offsets = [11, 0], sizes = [1, 32], strides = [1, 1]} : vector<32x128xf32> to vector<1x32xf32>
    %193 = vector.extract_strided_slice %0 {offsets = [12, 0], sizes = [1, 32], strides = [1, 1]} : vector<32x128xf32> to vector<1x32xf32>
    %cst_57 = arith.constant dense<0.000000e+00> : vector<16xf32>
    %194 = vector.multi_reduction <add>, %191, %cst_57 [1] : vector<16x32xf32> to vector<16xf32>
    %195 = vector.shape_cast %194 : vector<16xf32> to vector<16x1xf32>
    %cst_58 = arith.constant 3.200000e+01 : f32
    %196 = vector.broadcast %cst_58 : f32 to vector<16x1xf32>
    %197 = arith.divf %195, %196 : vector<16x1xf32>
    %198 = vector.broadcast %197 : vector<16x1xf32> to vector<16x32xf32>
    %199 = arith.subf %191, %198 : vector<16x32xf32>
    %200 = arith.mulf %199, %199 : vector<16x32xf32>
    %cst_59 = arith.constant dense<0.000000e+00> : vector<16xf32>
    %201 = vector.multi_reduction <add>, %200, %cst_59 [1] : vector<16x32xf32> to vector<16xf32>
    %202 = vector.shape_cast %201 : vector<16xf32> to vector<16x1xf32>
    %cst_60 = arith.constant 3.200000e+01 : f32
    %203 = vector.broadcast %cst_60 : f32 to vector<16x1xf32>
    %204 = arith.divf %202, %203 : vector<16x1xf32>
    %205 = vector.broadcast %197 : vector<16x1xf32> to vector<16x32xf32>
    %206 = arith.subf %191, %205 : vector<16x32xf32>
    %cst_61 = arith.constant 9.99999974E-6 : f32
    %207 = vector.broadcast %cst_61 : f32 to vector<16x1xf32>
    %208 = arith.addf %204, %207 : vector<16x1xf32>
    %209 = math.rsqrt %208 : vector<16x1xf32>
    %210 = vector.broadcast %209 : vector<16x1xf32> to vector<16x32xf32>
    %211 = arith.mulf %206, %210 : vector<16x32xf32>
    %212 = vector.broadcast %192 : vector<1x32xf32> to vector<16x32xf32>
    %213 = arith.mulf %211, %212 : vector<16x32xf32>
    %214 = vector.broadcast %193 : vector<1x32xf32> to vector<16x32xf32>
    %215 = arith.addf %213, %214 : vector<16x32xf32>
    %c0_62 = arith.constant 0 : index
    %c0_63 = arith.constant 0 : index
    %216 = vector.load %arg1[%c0_62, %c0_63] : memref<16x1xi32, #tpu.memory_space<vmem>>, vector<16x1xi32>
    %c0_64 = arith.constant 0 : index
    %c0_65 = arith.constant 0 : index
    %217 = vector.load %arg6[%c0_64, %c0_65] : memref<16x32xf32, #tpu.memory_space<vmem>>, vector<16x32xf32>
    %218 = vector.extract_strided_slice %0 {offsets = [2, 0], sizes = [1, 32], strides = [1, 1]} : vector<32x128xf32> to vector<1x32xf32>
    %219 = vector.extract_strided_slice %0 {offsets = [3, 0], sizes = [1, 32], strides = [1, 1]} : vector<32x128xf32> to vector<1x32xf32>
    %220 = tpu.iota {dimensions = array<i32: 1>} : vector<16x128xi32>
    %221 = vector.broadcast %216 : vector<16x1xi32> to vector<16x128xi32>
    %222 = arith.cmpi eq, %220, %221 : vector<16x128xi32>
    %223 = arith.extui %222 : vector<16x128xi1> to vector<16x128xi32>
    %224 = arith.sitofp %223 : vector<16x128xi32> to vector<16x128xf32>
    %cst_66 = arith.constant dense<0.000000e+00> : vector<16x32xf32>
    %225 = tpu.matmul %224, %1, %cst_66 {dimension_numbers = #tpu.dot_dimension_numbers<[1], [0], [0], [1], [0, 0, 1, 1], [], []>} : vector<16x128xf32>, vector<128x32xf32>, vector<16x32xf32> -> vector<16x32xf32>
    %226 = arith.addf %225, %217 : vector<16x32xf32>
    %cst_67 = arith.constant dense<0.000000e+00> : vector<16xf32>
    %227 = vector.multi_reduction <add>, %226, %cst_67 [1] : vector<16x32xf32> to vector<16xf32>
    %228 = vector.shape_cast %227 : vector<16xf32> to vector<16x1xf32>
    %cst_68 = arith.constant 3.200000e+01 : f32
    %229 = vector.broadcast %cst_68 : f32 to vector<16x1xf32>
    %230 = arith.divf %228, %229 : vector<16x1xf32>
    %231 = vector.broadcast %230 : vector<16x1xf32> to vector<16x32xf32>
    %232 = arith.subf %226, %231 : vector<16x32xf32>
    %233 = arith.mulf %232, %232 : vector<16x32xf32>
    %cst_69 = arith.constant dense<0.000000e+00> : vector<16xf32>
    %234 = vector.multi_reduction <add>, %233, %cst_69 [1] : vector<16x32xf32> to vector<16xf32>
    %235 = vector.shape_cast %234 : vector<16xf32> to vector<16x1xf32>
    %cst_70 = arith.constant 3.200000e+01 : f32
    %236 = vector.broadcast %cst_70 : f32 to vector<16x1xf32>
    %237 = arith.divf %235, %236 : vector<16x1xf32>
    %238 = vector.broadcast %230 : vector<16x1xf32> to vector<16x32xf32>
    %239 = arith.subf %226, %238 : vector<16x32xf32>
    %cst_71 = arith.constant 9.99999974E-6 : f32
    %240 = vector.broadcast %cst_71 : f32 to vector<16x1xf32>
    %241 = arith.addf %237, %240 : vector<16x1xf32>
    %242 = math.rsqrt %241 : vector<16x1xf32>
    %243 = vector.broadcast %242 : vector<16x1xf32> to vector<16x32xf32>
    %244 = arith.mulf %239, %243 : vector<16x32xf32>
    %245 = vector.broadcast %218 : vector<1x32xf32> to vector<16x32xf32>
    %246 = arith.mulf %244, %245 : vector<16x32xf32>
    %247 = vector.broadcast %219 : vector<1x32xf32> to vector<16x32xf32>
    %248 = arith.addf %246, %247 : vector<16x32xf32>
    %249 = tpu.iota {dimensions = array<i32: 0>} : vector<16x16xi32>
    %250 = tpu.iota {dimensions = array<i32: 1>} : vector<16x16xi32>
    %c0_i32_72 = arith.constant 0 : i32
    %251 = vector.broadcast %c0_i32_72 : i32 to vector<16x16xi32>
    %252 = arith.cmpi sge, %249, %251 : vector<16x16xi32>
    %c8_i32_73 = arith.constant 8 : i32
    %253 = vector.broadcast %c8_i32_73 : i32 to vector<16x16xi32>
    %254 = arith.cmpi slt, %249, %253 : vector<16x16xi32>
    %255 = arith.andi %252, %254 : vector<16x16xi1>
    %c0_i32_74 = arith.constant 0 : i32
    %256 = vector.broadcast %c0_i32_74 : i32 to vector<16x16xi32>
    %257 = arith.cmpi sge, %250, %256 : vector<16x16xi32>
    %258 = arith.andi %255, %257 : vector<16x16xi1>
    %c8_i32_75 = arith.constant 8 : i32
    %259 = vector.broadcast %c8_i32_75 : i32 to vector<16x16xi32>
    %260 = arith.cmpi slt, %250, %259 : vector<16x16xi32>
    %261 = arith.andi %258, %260 : vector<16x16xi1>
    %c8_i32_76 = arith.constant 8 : i32
    %262 = vector.broadcast %c8_i32_76 : i32 to vector<16x16xi32>
    %263 = arith.cmpi sge, %249, %262 : vector<16x16xi32>
    %c16_i32_77 = arith.constant 16 : i32
    %264 = vector.broadcast %c16_i32_77 : i32 to vector<16x16xi32>
    %265 = arith.cmpi slt, %249, %264 : vector<16x16xi32>
    %266 = arith.andi %263, %265 : vector<16x16xi1>
    %c8_i32_78 = arith.constant 8 : i32
    %267 = vector.broadcast %c8_i32_78 : i32 to vector<16x16xi32>
    %268 = arith.cmpi sge, %250, %267 : vector<16x16xi32>
    %269 = arith.andi %266, %268 : vector<16x16xi1>
    %c16_i32_79 = arith.constant 16 : i32
    %270 = vector.broadcast %c16_i32_79 : i32 to vector<16x16xi32>
    %271 = arith.cmpi slt, %250, %270 : vector<16x16xi32>
    %272 = arith.andi %269, %271 : vector<16x16xi1>
    %273 = arith.ori %261, %272 : vector<16x16xi1>
    %274 = arith.cmpi sge, %249, %250 : vector<16x16xi32>
    %275 = arith.andi %273, %274 : vector<16x16xi1>
    %c0_80 = arith.constant 0 : index
    %c0_81 = arith.constant 0 : index
    %276 = vector.load %arg13[%c0_80, %c0_81] : memref<32x32xf32, #tpu.memory_space<vmem>>, vector<32x32xf32>
    %277 = vector.extract_strided_slice %0 {offsets = [13, 0], sizes = [1, 32], strides = [1, 1]} : vector<32x128xf32> to vector<1x32xf32>
    %c0_82 = arith.constant 0 : index
    %c0_83 = arith.constant 0 : index
    %278 = vector.load %arg14[%c0_82, %c0_83] : memref<32x64xf32, #tpu.memory_space<vmem>>, vector<32x64xf32>
    %279 = vector.extract_strided_slice %0 {offsets = [14, 0], sizes = [1, 64], strides = [1, 1]} : vector<32x128xf32> to vector<1x64xf32>
    %c0_84 = arith.constant 0 : index
    %c0_85 = arith.constant 0 : index
    %280 = vector.load %arg15[%c0_84, %c0_85] : memref<32x32xf32, #tpu.memory_space<vmem>>, vector<32x32xf32>
    %281 = vector.extract_strided_slice %0 {offsets = [15, 0], sizes = [1, 32], strides = [1, 1]} : vector<32x128xf32> to vector<1x32xf32>
    %282 = arith.truncf %248 : vector<16x32xf32> to vector<16x32xbf16>
    %283 = arith.truncf %276 : vector<32x32xf32> to vector<32x32xbf16>
    %cst_86 = arith.constant dense<0.000000e+00> : vector<16x32xf32>
    %284 = tpu.matmul %282, %283, %cst_86 {dimension_numbers = #tpu.dot_dimension_numbers<[1], [0], [0], [1], [0, 0, 1, 1], [], []>} : vector<16x32xbf16>, vector<32x32xbf16>, vector<16x32xf32> -> vector<16x32xf32>
    %285 = vector.broadcast %277 : vector<1x32xf32> to vector<16x32xf32>
    %286 = arith.addf %284, %285 : vector<16x32xf32>
    %287 = arith.truncf %248 : vector<16x32xf32> to vector<16x32xbf16>
    %288 = arith.truncf %278 : vector<32x64xf32> to vector<32x64xbf16>
    %cst_87 = arith.constant dense<0.000000e+00> : vector<16x64xf32>
    %289 = tpu.matmul %287, %288, %cst_87 {dimension_numbers = #tpu.dot_dimension_numbers<[1], [0], [0], [1], [0, 0, 1, 1], [], []>} : vector<16x32xbf16>, vector<32x64xbf16>, vector<16x64xf32> -> vector<16x64xf32>
    %290 = vector.broadcast %279 : vector<1x64xf32> to vector<16x64xf32>
    %291 = arith.addf %289, %290 : vector<16x64xf32>
    %cst_88 = arith.constant 0.000000e+00 : f32
    %cst_89 = arith.constant -1.000000e+09 : f32
    %292 = vector.broadcast %cst_88 : f32 to vector<16x16xf32>
    %293 = vector.broadcast %cst_89 : f32 to vector<16x16xf32>
    %294 = arith.select %275, %292, %293 : vector<16x16xi1>, vector<16x16xf32>
    %295 = vector.extract_strided_slice %286 {offsets = [0, 0], sizes = [16, 16], strides = [1, 1]} : vector<16x32xf32> to vector<16x16xf32>
    %296 = vector.extract_strided_slice %291 {offsets = [0, 0], sizes = [16, 16], strides = [1, 1]} : vector<16x64xf32> to vector<16x16xf32>
    %297 = vector.extract_strided_slice %291 {offsets = [0, 32], sizes = [16, 16], strides = [1, 1]} : vector<16x64xf32> to vector<16x16xf32>
    %298 = arith.truncf %295 : vector<16x16xf32> to vector<16x16xbf16>
    %299 = arith.truncf %296 : vector<16x16xf32> to vector<16x16xbf16>
    %cst_90 = arith.constant dense<0.000000e+00> : vector<16x16xf32>
    %300 = tpu.matmul %298, %299, %cst_90 {dimension_numbers = #tpu.dot_dimension_numbers<[1], [1], [0], [0], [0, 0, 1, 0], [], []>} : vector<16x16xbf16>, vector<16x16xbf16>, vector<16x16xf32> -> vector<16x16xf32>
    %cst_91 = arith.constant 2.500000e-01 : f32
    %301 = vector.broadcast %cst_91 : f32 to vector<16x16xf32>
    %302 = arith.mulf %300, %301 : vector<16x16xf32>
    %303 = arith.addf %302, %294 : vector<16x16xf32>
    %cst_92 = arith.constant dense<0xFF800000> : vector<16xf32>
    %304 = vector.multi_reduction <maximumf>, %303, %cst_92 [1] : vector<16x16xf32> to vector<16xf32>
    %305 = vector.shape_cast %304 : vector<16xf32> to vector<16x1xf32>
    %306 = vector.broadcast %305 : vector<16x1xf32> to vector<16x16xf32>
    %307 = arith.subf %303, %306 : vector<16x16xf32>
    %308 = math.exp %307 : vector<16x16xf32>
    %cst_93 = arith.constant dense<0.000000e+00> : vector<16xf32>
    %309 = vector.multi_reduction <add>, %308, %cst_93 [1] : vector<16x16xf32> to vector<16xf32>
    %310 = vector.shape_cast %309 : vector<16xf32> to vector<16x1xf32>
    %311 = tpu.reciprocal %310 {approx = true} : vector<16x1xf32> -> vector<16x1xf32>
    %312 = vector.broadcast %311 : vector<16x1xf32> to vector<16x16xf32>
    %313 = arith.mulf %308, %312 : vector<16x16xf32>
    %314 = arith.truncf %313 : vector<16x16xf32> to vector<16x16xbf16>
    %315 = arith.truncf %297 : vector<16x16xf32> to vector<16x16xbf16>
    %cst_94 = arith.constant dense<0.000000e+00> : vector<16x16xf32>
    %316 = tpu.matmul %314, %315, %cst_94 {dimension_numbers = #tpu.dot_dimension_numbers<[1], [0], [0], [1], [0, 0, 1, 1], [], []>} : vector<16x16xbf16>, vector<16x16xbf16>, vector<16x16xf32> -> vector<16x16xf32>
    %317 = vector.extract_strided_slice %280 {offsets = [0, 0], sizes = [16, 32], strides = [1, 1]} : vector<32x32xf32> to vector<16x32xf32>
    %318 = arith.truncf %316 : vector<16x16xf32> to vector<16x16xbf16>
    %319 = arith.truncf %317 : vector<16x32xf32> to vector<16x32xbf16>
    %cst_95 = arith.constant dense<0.000000e+00> : vector<16x32xf32>
    %320 = tpu.matmul %318, %319, %cst_95 {dimension_numbers = #tpu.dot_dimension_numbers<[1], [0], [0], [1], [0, 0, 1, 1], [], []>} : vector<16x16xbf16>, vector<16x32xbf16>, vector<16x32xf32> -> vector<16x32xf32>
    %321 = vector.extract_strided_slice %286 {offsets = [0, 16], sizes = [16, 16], strides = [1, 1]} : vector<16x32xf32> to vector<16x16xf32>
    %322 = vector.extract_strided_slice %291 {offsets = [0, 16], sizes = [16, 16], strides = [1, 1]} : vector<16x64xf32> to vector<16x16xf32>
    %323 = vector.extract_strided_slice %291 {offsets = [0, 48], sizes = [16, 16], strides = [1, 1]} : vector<16x64xf32> to vector<16x16xf32>
    %324 = arith.truncf %321 : vector<16x16xf32> to vector<16x16xbf16>
    %325 = arith.truncf %322 : vector<16x16xf32> to vector<16x16xbf16>
    %cst_96 = arith.constant dense<0.000000e+00> : vector<16x16xf32>
    %326 = tpu.matmul %324, %325, %cst_96 {dimension_numbers = #tpu.dot_dimension_numbers<[1], [1], [0], [0], [0, 0, 1, 0], [], []>} : vector<16x16xbf16>, vector<16x16xbf16>, vector<16x16xf32> -> vector<16x16xf32>
    %cst_97 = arith.constant 2.500000e-01 : f32
    %327 = vector.broadcast %cst_97 : f32 to vector<16x16xf32>
    %328 = arith.mulf %326, %327 : vector<16x16xf32>
    %329 = arith.addf %328, %294 : vector<16x16xf32>
    %cst_98 = arith.constant dense<0xFF800000> : vector<16xf32>
    %330 = vector.multi_reduction <maximumf>, %329, %cst_98 [1] : vector<16x16xf32> to vector<16xf32>
    %331 = vector.shape_cast %330 : vector<16xf32> to vector<16x1xf32>
    %332 = vector.broadcast %331 : vector<16x1xf32> to vector<16x16xf32>
    %333 = arith.subf %329, %332 : vector<16x16xf32>
    %334 = math.exp %333 : vector<16x16xf32>
    %cst_99 = arith.constant dense<0.000000e+00> : vector<16xf32>
    %335 = vector.multi_reduction <add>, %334, %cst_99 [1] : vector<16x16xf32> to vector<16xf32>
    %336 = vector.shape_cast %335 : vector<16xf32> to vector<16x1xf32>
    %337 = tpu.reciprocal %336 {approx = true} : vector<16x1xf32> -> vector<16x1xf32>
    %338 = vector.broadcast %337 : vector<16x1xf32> to vector<16x16xf32>
    %339 = arith.mulf %334, %338 : vector<16x16xf32>
    %340 = arith.truncf %339 : vector<16x16xf32> to vector<16x16xbf16>
    %341 = arith.truncf %323 : vector<16x16xf32> to vector<16x16xbf16>
    %cst_100 = arith.constant dense<0.000000e+00> : vector<16x16xf32>
    %342 = tpu.matmul %340, %341, %cst_100 {dimension_numbers = #tpu.dot_dimension_numbers<[1], [0], [0], [1], [0, 0, 1, 1], [], []>} : vector<16x16xbf16>, vector<16x16xbf16>, vector<16x16xf32> -> vector<16x16xf32>
    %343 = vector.extract_strided_slice %280 {offsets = [16, 0], sizes = [16, 32], strides = [1, 1]} : vector<32x32xf32> to vector<16x32xf32>
    %344 = arith.truncf %342 : vector<16x16xf32> to vector<16x16xbf16>
    %345 = arith.truncf %343 : vector<16x32xf32> to vector<16x32xbf16>
    %cst_101 = arith.constant dense<0.000000e+00> : vector<16x32xf32>
    %346 = tpu.matmul %344, %345, %cst_101 {dimension_numbers = #tpu.dot_dimension_numbers<[1], [0], [0], [1], [0, 0, 1, 1], [], []>} : vector<16x16xbf16>, vector<16x32xbf16>, vector<16x32xf32> -> vector<16x32xf32>
    %347 = arith.addf %320, %346 : vector<16x32xf32>
    %348 = vector.broadcast %281 : vector<1x32xf32> to vector<16x32xf32>
    %349 = arith.addf %347, %348 : vector<16x32xf32>
    %350 = arith.addf %349, %248 : vector<16x32xf32>
    %351 = vector.extract_strided_slice %0 {offsets = [16, 0], sizes = [1, 32], strides = [1, 1]} : vector<32x128xf32> to vector<1x32xf32>
    %352 = vector.extract_strided_slice %0 {offsets = [17, 0], sizes = [1, 32], strides = [1, 1]} : vector<32x128xf32> to vector<1x32xf32>
    %cst_102 = arith.constant dense<0.000000e+00> : vector<16xf32>
    %353 = vector.multi_reduction <add>, %350, %cst_102 [1] : vector<16x32xf32> to vector<16xf32>
    %354 = vector.shape_cast %353 : vector<16xf32> to vector<16x1xf32>
    %cst_103 = arith.constant 3.200000e+01 : f32
    %355 = vector.broadcast %cst_103 : f32 to vector<16x1xf32>
    %356 = arith.divf %354, %355 : vector<16x1xf32>
    %357 = vector.broadcast %356 : vector<16x1xf32> to vector<16x32xf32>
    %358 = arith.subf %350, %357 : vector<16x32xf32>
    %359 = arith.mulf %358, %358 : vector<16x32xf32>
    %cst_104 = arith.constant dense<0.000000e+00> : vector<16xf32>
    %360 = vector.multi_reduction <add>, %359, %cst_104 [1] : vector<16x32xf32> to vector<16xf32>
    %361 = vector.shape_cast %360 : vector<16xf32> to vector<16x1xf32>
    %cst_105 = arith.constant 3.200000e+01 : f32
    %362 = vector.broadcast %cst_105 : f32 to vector<16x1xf32>
    %363 = arith.divf %361, %362 : vector<16x1xf32>
    %364 = vector.broadcast %356 : vector<16x1xf32> to vector<16x32xf32>
    %365 = arith.subf %350, %364 : vector<16x32xf32>
    %cst_106 = arith.constant 9.99999974E-6 : f32
    %366 = vector.broadcast %cst_106 : f32 to vector<16x1xf32>
    %367 = arith.addf %363, %366 : vector<16x1xf32>
    %368 = math.rsqrt %367 : vector<16x1xf32>
    %369 = vector.broadcast %368 : vector<16x1xf32> to vector<16x32xf32>
    %370 = arith.mulf %365, %369 : vector<16x32xf32>
    %371 = vector.broadcast %351 : vector<1x32xf32> to vector<16x32xf32>
    %372 = arith.mulf %370, %371 : vector<16x32xf32>
    %373 = vector.broadcast %352 : vector<1x32xf32> to vector<16x32xf32>
    %374 = arith.addf %372, %373 : vector<16x32xf32>
    %375 = tpu.iota {dimensions = array<i32: 0>} : vector<16x16xi32>
    %376 = tpu.iota {dimensions = array<i32: 1>} : vector<16x16xi32>
    %c0_i32_107 = arith.constant 0 : i32
    %377 = vector.broadcast %c0_i32_107 : i32 to vector<16x16xi32>
    %378 = arith.cmpi sge, %375, %377 : vector<16x16xi32>
    %c8_i32_108 = arith.constant 8 : i32
    %379 = vector.broadcast %c8_i32_108 : i32 to vector<16x16xi32>
    %380 = arith.cmpi slt, %375, %379 : vector<16x16xi32>
    %381 = arith.andi %378, %380 : vector<16x16xi1>
    %c0_i32_109 = arith.constant 0 : i32
    %382 = vector.broadcast %c0_i32_109 : i32 to vector<16x16xi32>
    %383 = arith.cmpi sge, %376, %382 : vector<16x16xi32>
    %384 = arith.andi %381, %383 : vector<16x16xi1>
    %c8_i32_110 = arith.constant 8 : i32
    %385 = vector.broadcast %c8_i32_110 : i32 to vector<16x16xi32>
    %386 = arith.cmpi slt, %376, %385 : vector<16x16xi32>
    %387 = arith.andi %384, %386 : vector<16x16xi1>
    %c8_i32_111 = arith.constant 8 : i32
    %388 = vector.broadcast %c8_i32_111 : i32 to vector<16x16xi32>
    %389 = arith.cmpi sge, %375, %388 : vector<16x16xi32>
    %c16_i32_112 = arith.constant 16 : i32
    %390 = vector.broadcast %c16_i32_112 : i32 to vector<16x16xi32>
    %391 = arith.cmpi slt, %375, %390 : vector<16x16xi32>
    %392 = arith.andi %389, %391 : vector<16x16xi1>
    %c8_i32_113 = arith.constant 8 : i32
    %393 = vector.broadcast %c8_i32_113 : i32 to vector<16x16xi32>
    %394 = arith.cmpi sge, %376, %393 : vector<16x16xi32>
    %395 = arith.andi %392, %394 : vector<16x16xi1>
    %c16_i32_114 = arith.constant 16 : i32
    %396 = vector.broadcast %c16_i32_114 : i32 to vector<16x16xi32>
    %397 = arith.cmpi slt, %376, %396 : vector<16x16xi32>
    %398 = arith.andi %395, %397 : vector<16x16xi1>
    %399 = arith.ori %387, %398 : vector<16x16xi1>
    %400 = vector.broadcast %37 : vector<1x16xi1> to vector<16x16xi1>
    %401 = arith.andi %399, %400 : vector<16x16xi1>
    %c0_115 = arith.constant 0 : index
    %c0_116 = arith.constant 0 : index
    %402 = vector.load %arg16[%c0_115, %c0_116] : memref<32x32xf32, #tpu.memory_space<vmem>>, vector<32x32xf32>
    %403 = vector.extract_strided_slice %0 {offsets = [18, 0], sizes = [1, 32], strides = [1, 1]} : vector<32x128xf32> to vector<1x32xf32>
    %c0_117 = arith.constant 0 : index
    %c0_118 = arith.constant 0 : index
    %404 = vector.load %arg17[%c0_117, %c0_118] : memref<32x64xf32, #tpu.memory_space<vmem>>, vector<32x64xf32>
    %405 = vector.extract_strided_slice %0 {offsets = [19, 0], sizes = [1, 64], strides = [1, 1]} : vector<32x128xf32> to vector<1x64xf32>
    %c0_119 = arith.constant 0 : index
    %c0_120 = arith.constant 0 : index
    %406 = vector.load %arg18[%c0_119, %c0_120] : memref<32x32xf32, #tpu.memory_space<vmem>>, vector<32x32xf32>
    %407 = vector.extract_strided_slice %0 {offsets = [20, 0], sizes = [1, 32], strides = [1, 1]} : vector<32x128xf32> to vector<1x32xf32>
    %408 = arith.truncf %374 : vector<16x32xf32> to vector<16x32xbf16>
    %409 = arith.truncf %402 : vector<32x32xf32> to vector<32x32xbf16>
    %cst_121 = arith.constant dense<0.000000e+00> : vector<16x32xf32>
    %410 = tpu.matmul %408, %409, %cst_121 {dimension_numbers = #tpu.dot_dimension_numbers<[1], [0], [0], [1], [0, 0, 1, 1], [], []>} : vector<16x32xbf16>, vector<32x32xbf16>, vector<16x32xf32> -> vector<16x32xf32>
    %411 = vector.broadcast %403 : vector<1x32xf32> to vector<16x32xf32>
    %412 = arith.addf %410, %411 : vector<16x32xf32>
    %413 = arith.truncf %215 : vector<16x32xf32> to vector<16x32xbf16>
    %414 = arith.truncf %404 : vector<32x64xf32> to vector<32x64xbf16>
    %cst_122 = arith.constant dense<0.000000e+00> : vector<16x64xf32>
    %415 = tpu.matmul %413, %414, %cst_122 {dimension_numbers = #tpu.dot_dimension_numbers<[1], [0], [0], [1], [0, 0, 1, 1], [], []>} : vector<16x32xbf16>, vector<32x64xbf16>, vector<16x64xf32> -> vector<16x64xf32>
    %416 = vector.broadcast %405 : vector<1x64xf32> to vector<16x64xf32>
    %417 = arith.addf %415, %416 : vector<16x64xf32>
    %cst_123 = arith.constant 0.000000e+00 : f32
    %cst_124 = arith.constant -1.000000e+09 : f32
    %418 = vector.broadcast %cst_123 : f32 to vector<16x16xf32>
    %419 = vector.broadcast %cst_124 : f32 to vector<16x16xf32>
    %420 = arith.select %401, %418, %419 : vector<16x16xi1>, vector<16x16xf32>
    %421 = vector.extract_strided_slice %412 {offsets = [0, 0], sizes = [16, 16], strides = [1, 1]} : vector<16x32xf32> to vector<16x16xf32>
    %422 = vector.extract_strided_slice %417 {offsets = [0, 0], sizes = [16, 16], strides = [1, 1]} : vector<16x64xf32> to vector<16x16xf32>
    %423 = vector.extract_strided_slice %417 {offsets = [0, 32], sizes = [16, 16], strides = [1, 1]} : vector<16x64xf32> to vector<16x16xf32>
    %424 = arith.truncf %421 : vector<16x16xf32> to vector<16x16xbf16>
    %425 = arith.truncf %422 : vector<16x16xf32> to vector<16x16xbf16>
    %cst_125 = arith.constant dense<0.000000e+00> : vector<16x16xf32>
    %426 = tpu.matmul %424, %425, %cst_125 {dimension_numbers = #tpu.dot_dimension_numbers<[1], [1], [0], [0], [0, 0, 1, 0], [], []>} : vector<16x16xbf16>, vector<16x16xbf16>, vector<16x16xf32> -> vector<16x16xf32>
    %cst_126 = arith.constant 2.500000e-01 : f32
    %427 = vector.broadcast %cst_126 : f32 to vector<16x16xf32>
    %428 = arith.mulf %426, %427 : vector<16x16xf32>
    %429 = arith.addf %428, %420 : vector<16x16xf32>
    %cst_127 = arith.constant dense<0xFF800000> : vector<16xf32>
    %430 = vector.multi_reduction <maximumf>, %429, %cst_127 [1] : vector<16x16xf32> to vector<16xf32>
    %431 = vector.shape_cast %430 : vector<16xf32> to vector<16x1xf32>
    %432 = vector.broadcast %431 : vector<16x1xf32> to vector<16x16xf32>
    %433 = arith.subf %429, %432 : vector<16x16xf32>
    %434 = math.exp %433 : vector<16x16xf32>
    %cst_128 = arith.constant dense<0.000000e+00> : vector<16xf32>
    %435 = vector.multi_reduction <add>, %434, %cst_128 [1] : vector<16x16xf32> to vector<16xf32>
    %436 = vector.shape_cast %435 : vector<16xf32> to vector<16x1xf32>
    %437 = tpu.reciprocal %436 {approx = true} : vector<16x1xf32> -> vector<16x1xf32>
    %438 = vector.broadcast %437 : vector<16x1xf32> to vector<16x16xf32>
    %439 = arith.mulf %434, %438 : vector<16x16xf32>
    %440 = arith.truncf %439 : vector<16x16xf32> to vector<16x16xbf16>
    %441 = arith.truncf %423 : vector<16x16xf32> to vector<16x16xbf16>
    %cst_129 = arith.constant dense<0.000000e+00> : vector<16x16xf32>
    %442 = tpu.matmul %440, %441, %cst_129 {dimension_numbers = #tpu.dot_dimension_numbers<[1], [0], [0], [1], [0, 0, 1, 1], [], []>} : vector<16x16xbf16>, vector<16x16xbf16>, vector<16x16xf32> -> vector<16x16xf32>
    %443 = vector.extract_strided_slice %406 {offsets = [0, 0], sizes = [16, 32], strides = [1, 1]} : vector<32x32xf32> to vector<16x32xf32>
    %444 = arith.truncf %442 : vector<16x16xf32> to vector<16x16xbf16>
    %445 = arith.truncf %443 : vector<16x32xf32> to vector<16x32xbf16>
    %cst_130 = arith.constant dense<0.000000e+00> : vector<16x32xf32>
    %446 = tpu.matmul %444, %445, %cst_130 {dimension_numbers = #tpu.dot_dimension_numbers<[1], [0], [0], [1], [0, 0, 1, 1], [], []>} : vector<16x16xbf16>, vector<16x32xbf16>, vector<16x32xf32> -> vector<16x32xf32>
    %447 = vector.extract_strided_slice %412 {offsets = [0, 16], sizes = [16, 16], strides = [1, 1]} : vector<16x32xf32> to vector<16x16xf32>
    %448 = vector.extract_strided_slice %417 {offsets = [0, 16], sizes = [16, 16], strides = [1, 1]} : vector<16x64xf32> to vector<16x16xf32>
    %449 = vector.extract_strided_slice %417 {offsets = [0, 48], sizes = [16, 16], strides = [1, 1]} : vector<16x64xf32> to vector<16x16xf32>
    %450 = arith.truncf %447 : vector<16x16xf32> to vector<16x16xbf16>
    %451 = arith.truncf %448 : vector<16x16xf32> to vector<16x16xbf16>
    %cst_131 = arith.constant dense<0.000000e+00> : vector<16x16xf32>
    %452 = tpu.matmul %450, %451, %cst_131 {dimension_numbers = #tpu.dot_dimension_numbers<[1], [1], [0], [0], [0, 0, 1, 0], [], []>} : vector<16x16xbf16>, vector<16x16xbf16>, vector<16x16xf32> -> vector<16x16xf32>
    %cst_132 = arith.constant 2.500000e-01 : f32
    %453 = vector.broadcast %cst_132 : f32 to vector<16x16xf32>
    %454 = arith.mulf %452, %453 : vector<16x16xf32>
    %455 = arith.addf %454, %420 : vector<16x16xf32>
    %cst_133 = arith.constant dense<0xFF800000> : vector<16xf32>
    %456 = vector.multi_reduction <maximumf>, %455, %cst_133 [1] : vector<16x16xf32> to vector<16xf32>
    %457 = vector.shape_cast %456 : vector<16xf32> to vector<16x1xf32>
    %458 = vector.broadcast %457 : vector<16x1xf32> to vector<16x16xf32>
    %459 = arith.subf %455, %458 : vector<16x16xf32>
    %460 = math.exp %459 : vector<16x16xf32>
    %cst_134 = arith.constant dense<0.000000e+00> : vector<16xf32>
    %461 = vector.multi_reduction <add>, %460, %cst_134 [1] : vector<16x16xf32> to vector<16xf32>
    %462 = vector.shape_cast %461 : vector<16xf32> to vector<16x1xf32>
    %463 = tpu.reciprocal %462 {approx = true} : vector<16x1xf32> -> vector<16x1xf32>
    %464 = vector.broadcast %463 : vector<16x1xf32> to vector<16x16xf32>
    %465 = arith.mulf %460, %464 : vector<16x16xf32>
    %466 = arith.truncf %465 : vector<16x16xf32> to vector<16x16xbf16>
    %467 = arith.truncf %449 : vector<16x16xf32> to vector<16x16xbf16>
    %cst_135 = arith.constant dense<0.000000e+00> : vector<16x16xf32>
    %468 = tpu.matmul %466, %467, %cst_135 {dimension_numbers = #tpu.dot_dimension_numbers<[1], [0], [0], [1], [0, 0, 1, 1], [], []>} : vector<16x16xbf16>, vector<16x16xbf16>, vector<16x16xf32> -> vector<16x16xf32>
    %469 = vector.extract_strided_slice %406 {offsets = [16, 0], sizes = [16, 32], strides = [1, 1]} : vector<32x32xf32> to vector<16x32xf32>
    %470 = arith.truncf %468 : vector<16x16xf32> to vector<16x16xbf16>
    %471 = arith.truncf %469 : vector<16x32xf32> to vector<16x32xbf16>
    %cst_136 = arith.constant dense<0.000000e+00> : vector<16x32xf32>
    %472 = tpu.matmul %470, %471, %cst_136 {dimension_numbers = #tpu.dot_dimension_numbers<[1], [0], [0], [1], [0, 0, 1, 1], [], []>} : vector<16x16xbf16>, vector<16x32xbf16>, vector<16x32xf32> -> vector<16x32xf32>
    %473 = arith.addf %446, %472 : vector<16x32xf32>
    %474 = vector.broadcast %407 : vector<1x32xf32> to vector<16x32xf32>
    %475 = arith.addf %473, %474 : vector<16x32xf32>
    %476 = arith.addf %475, %374 : vector<16x32xf32>
    %477 = vector.extract_strided_slice %0 {offsets = [21, 0], sizes = [1, 32], strides = [1, 1]} : vector<32x128xf32> to vector<1x32xf32>
    %478 = vector.extract_strided_slice %0 {offsets = [22, 0], sizes = [1, 32], strides = [1, 1]} : vector<32x128xf32> to vector<1x32xf32>
    %cst_137 = arith.constant dense<0.000000e+00> : vector<16xf32>
    %479 = vector.multi_reduction <add>, %476, %cst_137 [1] : vector<16x32xf32> to vector<16xf32>
    %480 = vector.shape_cast %479 : vector<16xf32> to vector<16x1xf32>
    %cst_138 = arith.constant 3.200000e+01 : f32
    %481 = vector.broadcast %cst_138 : f32 to vector<16x1xf32>
    %482 = arith.divf %480, %481 : vector<16x1xf32>
    %483 = vector.broadcast %482 : vector<16x1xf32> to vector<16x32xf32>
    %484 = arith.subf %476, %483 : vector<16x32xf32>
    %485 = arith.mulf %484, %484 : vector<16x32xf32>
    %cst_139 = arith.constant dense<0.000000e+00> : vector<16xf32>
    %486 = vector.multi_reduction <add>, %485, %cst_139 [1] : vector<16x32xf32> to vector<16xf32>
    %487 = vector.shape_cast %486 : vector<16xf32> to vector<16x1xf32>
    %cst_140 = arith.constant 3.200000e+01 : f32
    %488 = vector.broadcast %cst_140 : f32 to vector<16x1xf32>
    %489 = arith.divf %487, %488 : vector<16x1xf32>
    %490 = vector.broadcast %482 : vector<16x1xf32> to vector<16x32xf32>
    %491 = arith.subf %476, %490 : vector<16x32xf32>
    %cst_141 = arith.constant 9.99999974E-6 : f32
    %492 = vector.broadcast %cst_141 : f32 to vector<16x1xf32>
    %493 = arith.addf %489, %492 : vector<16x1xf32>
    %494 = math.rsqrt %493 : vector<16x1xf32>
    %495 = vector.broadcast %494 : vector<16x1xf32> to vector<16x32xf32>
    %496 = arith.mulf %491, %495 : vector<16x32xf32>
    %497 = vector.broadcast %477 : vector<1x32xf32> to vector<16x32xf32>
    %498 = arith.mulf %496, %497 : vector<16x32xf32>
    %499 = vector.broadcast %478 : vector<1x32xf32> to vector<16x32xf32>
    %500 = arith.addf %498, %499 : vector<16x32xf32>
    %c0_142 = arith.constant 0 : index
    %c0_143 = arith.constant 0 : index
    %501 = vector.load %arg19[%c0_142, %c0_143] : memref<32x64xf32, #tpu.memory_space<vmem>>, vector<32x64xf32>
    %502 = vector.extract_strided_slice %0 {offsets = [23, 0], sizes = [1, 64], strides = [1, 1]} : vector<32x128xf32> to vector<1x64xf32>
    %c0_144 = arith.constant 0 : index
    %c0_145 = arith.constant 0 : index
    %503 = vector.load %arg20[%c0_144, %c0_145] : memref<64x32xf32, #tpu.memory_space<vmem>>, vector<64x32xf32>
    %504 = vector.extract_strided_slice %0 {offsets = [24, 0], sizes = [1, 32], strides = [1, 1]} : vector<32x128xf32> to vector<1x32xf32>
    %505 = arith.truncf %500 : vector<16x32xf32> to vector<16x32xbf16>
    %506 = arith.truncf %501 : vector<32x64xf32> to vector<32x64xbf16>
    %cst_146 = arith.constant dense<0.000000e+00> : vector<16x64xf32>
    %507 = tpu.matmul %505, %506, %cst_146 {dimension_numbers = #tpu.dot_dimension_numbers<[1], [0], [0], [1], [0, 0, 1, 1], [], []>} : vector<16x32xbf16>, vector<32x64xbf16>, vector<16x64xf32> -> vector<16x64xf32>
    %508 = vector.broadcast %502 : vector<1x64xf32> to vector<16x64xf32>
    %509 = arith.addf %507, %508 : vector<16x64xf32>
    %510 = arith.mulf %509, %509 : vector<16x64xf32>
    %511 = arith.mulf %509, %510 : vector<16x64xf32>
    %cst_147 = arith.constant 4.471500e-02 : f32
    %512 = vector.broadcast %cst_147 : f32 to vector<16x64xf32>
    %513 = arith.mulf %512, %511 : vector<16x64xf32>
    %514 = arith.addf %509, %513 : vector<16x64xf32>
    %cst_148 = arith.constant 0.797884583 : f32
    %515 = vector.broadcast %cst_148 : f32 to vector<16x64xf32>
    %516 = arith.mulf %515, %514 : vector<16x64xf32>
    %517 = math.tanh %516 : vector<16x64xf32>
    %cst_149 = arith.constant 1.000000e+00 : f32
    %518 = vector.broadcast %cst_149 : f32 to vector<16x64xf32>
    %519 = arith.addf %518, %517 : vector<16x64xf32>
    %cst_150 = arith.constant 5.000000e-01 : f32
    %520 = vector.broadcast %cst_150 : f32 to vector<16x64xf32>
    %521 = arith.mulf %520, %519 : vector<16x64xf32>
    %522 = arith.mulf %509, %521 : vector<16x64xf32>
    %523 = arith.truncf %522 : vector<16x64xf32> to vector<16x64xbf16>
    %524 = arith.truncf %503 : vector<64x32xf32> to vector<64x32xbf16>
    %cst_151 = arith.constant dense<0.000000e+00> : vector<16x32xf32>
    %525 = tpu.matmul %523, %524, %cst_151 {dimension_numbers = #tpu.dot_dimension_numbers<[1], [0], [0], [1], [0, 0, 1, 1], [], []>} : vector<16x64xbf16>, vector<64x32xbf16>, vector<16x32xf32> -> vector<16x32xf32>
    %526 = vector.broadcast %504 : vector<1x32xf32> to vector<16x32xf32>
    %527 = arith.addf %525, %526 : vector<16x32xf32>
    %528 = arith.addf %527, %500 : vector<16x32xf32>
    %529 = vector.extract_strided_slice %0 {offsets = [25, 0], sizes = [1, 32], strides = [1, 1]} : vector<32x128xf32> to vector<1x32xf32>
    %530 = vector.extract_strided_slice %0 {offsets = [26, 0], sizes = [1, 32], strides = [1, 1]} : vector<32x128xf32> to vector<1x32xf32>
    %cst_152 = arith.constant dense<0.000000e+00> : vector<16xf32>
    %531 = vector.multi_reduction <add>, %528, %cst_152 [1] : vector<16x32xf32> to vector<16xf32>
    %532 = vector.shape_cast %531 : vector<16xf32> to vector<16x1xf32>
    %cst_153 = arith.constant 3.200000e+01 : f32
    %533 = vector.broadcast %cst_153 : f32 to vector<16x1xf32>
    %534 = arith.divf %532, %533 : vector<16x1xf32>
    %535 = vector.broadcast %534 : vector<16x1xf32> to vector<16x32xf32>
    %536 = arith.subf %528, %535 : vector<16x32xf32>
    %537 = arith.mulf %536, %536 : vector<16x32xf32>
    %cst_154 = arith.constant dense<0.000000e+00> : vector<16xf32>
    %538 = vector.multi_reduction <add>, %537, %cst_154 [1] : vector<16x32xf32> to vector<16xf32>
    %539 = vector.shape_cast %538 : vector<16xf32> to vector<16x1xf32>
    %cst_155 = arith.constant 3.200000e+01 : f32
    %540 = vector.broadcast %cst_155 : f32 to vector<16x1xf32>
    %541 = arith.divf %539, %540 : vector<16x1xf32>
    %542 = vector.broadcast %534 : vector<16x1xf32> to vector<16x32xf32>
    %543 = arith.subf %528, %542 : vector<16x32xf32>
    %cst_156 = arith.constant 9.99999974E-6 : f32
    %544 = vector.broadcast %cst_156 : f32 to vector<16x1xf32>
    %545 = arith.addf %541, %544 : vector<16x1xf32>
    %546 = math.rsqrt %545 : vector<16x1xf32>
    %547 = vector.broadcast %546 : vector<16x1xf32> to vector<16x32xf32>
    %548 = arith.mulf %543, %547 : vector<16x32xf32>
    %549 = vector.broadcast %529 : vector<1x32xf32> to vector<16x32xf32>
    %550 = arith.mulf %548, %549 : vector<16x32xf32>
    %551 = vector.broadcast %530 : vector<1x32xf32> to vector<16x32xf32>
    %552 = arith.addf %550, %551 : vector<16x32xf32>
    %553 = arith.truncf %552 : vector<16x32xf32> to vector<16x32xbf16>
    %554 = arith.truncf %1 : vector<128x32xf32> to vector<128x32xbf16>
    %cst_157 = arith.constant dense<0.000000e+00> : vector<16x128xf32>
    %555 = tpu.matmul %553, %554, %cst_157 {dimension_numbers = #tpu.dot_dimension_numbers<[1], [1], [0], [0], [0, 0, 1, 0], [], []>} : vector<16x32xbf16>, vector<128x32xbf16>, vector<16x128xf32> -> vector<16x128xf32>
    %556 = vector.extract_strided_slice %0 {offsets = [27, 0], sizes = [1, 128], strides = [1, 1]} : vector<32x128xf32> to vector<1x128xf32>
    %557 = vector.broadcast %556 : vector<1x128xf32> to vector<16x128xf32>
    %558 = arith.addf %555, %557 : vector<16x128xf32>
    %c0_158 = arith.constant 0 : index
    %c0_159 = arith.constant 0 : index
    %559 = vector.load %arg21[%c0_158, %c0_159] : memref<16x128xf32, #tpu.memory_space<vmem>>, vector<16x128xf32>
    tpu.vector_store %arg21[%c0_158, %c0_159], %558 {strides = array<i32>} : memref<16x128xf32, #tpu.memory_space<vmem>>, vector<16x128xf32>,
    %c0_160 = arith.constant 0 : index
    %c0_161 = arith.constant 0 : index
    %560 = vector.load %arg2[%c0_160, %c0_161] : memref<16x1xi32, #tpu.memory_space<vmem>>, vector<16x1xi32>
    %cst_162 = arith.constant dense<0xFF800000> : vector<16xf32>
    %561 = vector.multi_reduction <maximumf>, %558, %cst_162 [1] : vector<16x128xf32> to vector<16xf32>
    %562 = vector.shape_cast %561 : vector<16xf32> to vector<16x1xf32>
    %563 = vector.broadcast %562 : vector<16x1xf32> to vector<16x128xf32>
    %564 = arith.subf %558, %563 : vector<16x128xf32>
    %565 = math.exp %564 : vector<16x128xf32>
    %cst_163 = arith.constant dense<0.000000e+00> : vector<16xf32>
    %566 = vector.multi_reduction <add>, %565, %cst_163 [1] : vector<16x128xf32> to vector<16xf32>
    %567 = vector.shape_cast %566 : vector<16xf32> to vector<16x1xf32>
    %568 = math.log %567 : vector<16x1xf32>
    %569 = arith.addf %562, %568 : vector<16x1xf32>
    %570 = tpu.iota {dimensions = array<i32: 1>} : vector<16x128xi32>
    %571 = vector.broadcast %560 : vector<16x1xi32> to vector<16x128xi32>
    %572 = arith.cmpi eq, %570, %571 : vector<16x128xi32>
    %cst_164 = arith.constant 0.000000e+00 : f32
    %573 = vector.broadcast %cst_164 : f32 to vector<16x128xf32>
    %574 = arith.select %572, %558, %573 : vector<16x128xi1>, vector<16x128xf32>
    %cst_165 = arith.constant dense<0.000000e+00> : vector<16xf32>
    %575 = vector.multi_reduction <add>, %574, %cst_165 [1] : vector<16x128xf32> to vector<16xf32>
    %576 = vector.shape_cast %575 : vector<16xf32> to vector<16x1xf32>
    %c-100_i32 = arith.constant -100 : i32
    %577 = vector.broadcast %c-100_i32 : i32 to vector<16x1xi32>
    %578 = arith.cmpi ne, %560, %577 : vector<16x1xi32>
    %579 = arith.subf %569, %576 : vector<16x1xf32>
    %cst_166 = arith.constant 0.000000e+00 : f32
    %580 = vector.broadcast %cst_166 : f32 to vector<16x1xf32>
    %581 = arith.select %578, %579, %580 : vector<16x1xi1>, vector<16x1xf32>
    %582 = arith.extui %578 : vector<16x1xi1> to vector<16x1xi32>
    %583 = arith.sitofp %582 : vector<16x1xi32> to vector<16x1xf32>
    %584 = vector.shape_cast %583 : vector<16x1xf32> to vector<1x16x1xf32>
    %cst_167 = arith.constant dense<0.000000e+00> : vector<1xf32>
    %585 = vector.multi_reduction <add>, %584, %cst_167 [1, 2] : vector<1x16x1xf32> to vector<1xf32>
    %586 = vector.shape_cast %585 : vector<1xf32> to vector<1x1x1xf32>
    %587 = vector.extract %586[0, 0, 0] : f32 from vector<1x1x1xf32>
    %588 = vector.shape_cast %581 : vector<16x1xf32> to vector<1x16x1xf32>
    %cst_168 = arith.constant dense<0.000000e+00> : vector<1xf32>
    %589 = vector.multi_reduction <add>, %588, %cst_168 [1, 2] : vector<1x16x1xf32> to vector<1xf32>
    %590 = vector.shape_cast %589 : vector<1xf32> to vector<1x1x1xf32>
    %591 = vector.extract %590[0, 0, 0] : f32 from vector<1x1x1xf32>
    %592 = vector.broadcast %591 : f32 to vector<1x1xf32>
    %cst_169 = arith.constant 1.000000e+00 : f32
    %593 = arith.maximumf %587, %cst_169 : f32
    %594 = vector.broadcast %593 : f32 to vector<1x1xf32>
    %595 = arith.divf %592, %594 : vector<1x1xf32>
    %c0_170 = arith.constant 0 : index
    %c0_171 = arith.constant 0 : index
    %596 = vector.load %arg22[%c0_170, %c0_171] : memref<1x1xf32, #tpu.memory_space<vmem>>, vector<1x1xf32>
    tpu.vector_store %arg22[%c0_170, %c0_171], %595 {strides = array<i32>} : memref<1x1xf32, #tpu.memory_space<vmem>>, vector<1x1xf32>,
    return
  }
}

</mosaic_0001>

<llo_original>
// kernel: music_bart_forward.1
$region0: #{music_bart_forward.1}
  #allocation0 [shape = 'u32[]', space=smem, size = 0x4, offset = 0x4, fixed_abs, tag = 'smem constant byte address 0x4 - core index']
  #allocation1 [shape = 'u32[72,128]{1,0:T(1,128)}', space=vmem, size = 0x9000, scoped, tag = 'internal scratch']
  %s0 = inlined_call_operand.vmem [shape: s32[16,1], index: 0, kind: input, shape index: {}]
  %s1 = inlined_call_operand.vmem [shape: s32[16,1], index: 1, kind: input, shape index: {}]
  %s2 = inlined_call_operand.vmem [shape: s32[16,1], index: 2, kind: input, shape index: {}]
  %s3 = inlined_call_operand.vmem [shape: f32[1,16], index: 3, kind: input, shape index: {}]
  %s4 = inlined_call_operand.vmem [shape: f32[128,32], index: 4, kind: input, shape index: {}]
  %s5 = inlined_call_operand.vmem [shape: f32[16,32], index: 5, kind: input, shape index: {}]
  %s6 = inlined_call_operand.vmem [shape: f32[16,32], index: 6, kind: input, shape index: {}]
  %s7 = inlined_call_operand.vmem [shape: f32[32,128], index: 7, kind: input, shape index: {}]
  %s8 = inlined_call_operand.vmem [shape: f32[32,32], index: 8, kind: input, shape index: {}]
  %s9 = inlined_call_operand.vmem [shape: f32[32,64], index: 9, kind: input, shape index: {}]
  %s10 = inlined_call_operand.vmem [shape: f32[32,32], index: 10, kind: input, shape index: {}]
  %s11 = inlined_call_operand.vmem [shape: f32[32,64], index: 11, kind: input, shape index: {}]
  %s12 = inlined_call_operand.vmem [shape: f32[64,32], index: 12, kind: input, shape index: {}]
  %s13 = inlined_call_operand.vmem [shape: f32[32,32], index: 13, kind: input, shape index: {}]
  %s14 = inlined_call_operand.vmem [shape: f32[32,64], index: 14, kind: input, shape index: {}]
  %s15 = inlined_call_operand.vmem [shape: f32[32,32], index: 15, kind: input, shape index: {}]
  %s16 = inlined_call_operand.vmem [shape: f32[32,32], index: 16, kind: input, shape index: {}]
  %s17 = inlined_call_operand.vmem [shape: f32[32,64], index: 17, kind: input, shape index: {}]
  %s18 = inlined_call_operand.vmem [shape: f32[32,32], index: 18, kind: input, shape index: {}]
  %s19 = inlined_call_operand.vmem [shape: f32[32,64], index: 19, kind: input, shape index: {}]
  %s20 = inlined_call_operand.vmem [shape: f32[64,32], index: 20, kind: input, shape index: {}]
  %s21 = inlined_call_operand.hbm [shape: f32[16,128], index: 21, kind: output, shape index: {0}]
  %s22 = inlined_call_operand.hbm [shape: f32[1,1], index: 22, kind: output, shape index: {1}]
  %23 = xla_tuple %s21, %s22
  %s24 = sld [smem:[#allocation0]]
  $region102: #{music_bart_forward.1} parent=0
    _
  %s26 = ssub.s32 1, %s24
  %s27 = scalar_select 0, %s26, %s24
  $region1: #{music_bart_forward.1} parent=0
    #allocation2 [shape = 'u8[8192]{0}', space=vmem, size = 0x2000, scoped, tag = 'output window, operand 0, single buffered']
    #allocation3 [shape = 's32[1]{0}', space=sflag, size = 0x4, scoped, tag = 'scoped memory for music_bart_forward.1']
    #allocation4 [shape = 'u8[512]{0}', space=vmem, size = 0x400, scoped, tag = 'output window, operand 1, single buffered']
    #allocation5 [shape = 's32[1]{0}', space=sflag, size = 0x4, scoped, tag = 'scoped memory for music_bart_forward.1']
    %28 = vsyncpa [#allocation3], 0
    %29 = vsyncpa [#allocation5], 0
    // Predicated region
    $region2: #{music_bart_forward.1} parent=1 // pred_check
      _
    $region3: #{music_bart_forward.1} parent=1 // pred_check_branch
      %31 = sbr.rel (0) target = $region5
    $region4: #{music_bart_forward.1} parent=1 // pred_region
      _
    $region5: #{music_bart_forward.1} parent=1 // pred_fallthru
      _
    // Predicated region
    $region6: #{music_bart_forward.1} parent=1 // pred_check
      _
    $region7: #{music_bart_forward.1} parent=1 // pred_check_branch
      %33 = sbr.rel (0) target = $region9
    $region8: #{music_bart_forward.1} parent=1 // pred_region
      _
    $region9: #{music_bart_forward.1} parent=1 // pred_fallthru
      _
    // Predicated region
    $region10: #{music_bart_forward.1} parent=1 // pred_check
      _
    $region11: #{music_bart_forward.1} parent=1 // pred_check_branch
      %35 = sbr.rel (0) target = $region13
    $region12: #{music_bart_forward.1} parent=1 // pred_region
      _
    $region13: #{music_bart_forward.1} parent=1 // pred_fallthru
      _
    // Predicated region
    $region14: #{music_bart_forward.1} parent=1 // pred_check
      _
    $region15: #{music_bart_forward.1} parent=1 // pred_check_branch
      %37 = sbr.rel (0) target = $region17
    $region16: #{music_bart_forward.1} parent=1 // pred_region
      _
    $region17: #{music_bart_forward.1} parent=1 // pred_fallthru
      _
    // Predicated region
    $region18: #{music_bart_forward.1} parent=1 // pred_check
      _
    $region19: #{music_bart_forward.1} parent=1 // pred_check_branch
      %39 = sbr.rel (0) target = $region21
    $region20: #{music_bart_forward.1} parent=1 // pred_region
      _
    $region21: #{music_bart_forward.1} parent=1 // pred_fallthru
      _
    // Predicated region
    $region22: #{music_bart_forward.1} parent=1 // pred_check
      _
    $region23: #{music_bart_forward.1} parent=1 // pred_check_branch
      %41 = sbr.rel (0) target = $region25
    $region24: #{music_bart_forward.1} parent=1 // pred_region
      _
    $region25: #{music_bart_forward.1} parent=1 // pred_fallthru
      _
    // Predicated region
    $region26: #{music_bart_forward.1} parent=1 // pred_check
      _
    $region27: #{music_bart_forward.1} parent=1 // pred_check_branch
      %43 = sbr.rel (0) target = $region29
    $region28: #{music_bart_forward.1} parent=1 // pred_region
      _
    $region29: #{music_bart_forward.1} parent=1 // pred_fallthru
      _
    // Predicated region
    $region30: #{music_bart_forward.1} parent=1 // pred_check
      _
    $region31: #{music_bart_forward.1} parent=1 // pred_check_branch
      %45 = sbr.rel (0) target = $region33
    $region32: #{music_bart_forward.1} parent=1 // pred_region
      _
    $region33: #{music_bart_forward.1} parent=1 // pred_fallthru
      _
    // Predicated region
    $region34: #{music_bart_forward.1} parent=1 // pred_check
      _
    $region35: #{music_bart_forward.1} parent=1 // pred_check_branch
      %47 = sbr.rel (0) target = $region37
    $region36: #{music_bart_forward.1} parent=1 // pred_region
      _
    $region37: #{music_bart_forward.1} parent=1 // pred_fallthru
      _
    // Predicated region
    $region38: #{music_bart_forward.1} parent=1 // pred_check
      _
    $region39: #{music_bart_forward.1} parent=1 // pred_check_branch
      %49 = sbr.rel (0) target = $region41
    $region40: #{music_bart_forward.1} parent=1 // pred_region
      _
    $region41: #{music_bart_forward.1} parent=1 // pred_fallthru
      _
    // Predicated region
    $region42: #{music_bart_forward.1} parent=1 // pred_check
      _
    $region43: #{music_bart_forward.1} parent=1 // pred_check_branch
      %51 = sbr.rel (0) target = $region45
    $region44: #{music_bart_forward.1} parent=1 // pred_region
      _
    $region45: #{music_bart_forward.1} parent=1 // pred_fallthru
      _
    // Predicated region
    $region46: #{music_bart_forward.1} parent=1 // pred_check
      _
    $region47: #{music_bart_forward.1} parent=1 // pred_check_branch
      %53 = sbr.rel (0) target = $region49
    $region48: #{music_bart_forward.1} parent=1 // pred_region
      _
    $region49: #{music_bart_forward.1} parent=1 // pred_fallthru
      _
    // Predicated region
    $region50: #{music_bart_forward.1} parent=1 // pred_check
      _
    $region51: #{music_bart_forward.1} parent=1 // pred_check_branch
      %55 = sbr.rel (0) target = $region53
    $region52: #{music_bart_forward.1} parent=1 // pred_region
      _
    $region53: #{music_bart_forward.1} parent=1 // pred_fallthru
      _
    // Predicated region
    $region54: #{music_bart_forward.1} parent=1 // pred_check
      _
    $region55: #{music_bart_forward.1} parent=1 // pred_check_branch
      %57 = sbr.rel (0) target = $region57
    $region56: #{music_bart_forward.1} parent=1 // pred_region
      _
    $region57: #{music_bart_forward.1} parent=1 // pred_fallthru
      _
    // Predicated region
    $region58: #{music_bart_forward.1} parent=1 // pred_check
      _
    $region59: #{music_bart_forward.1} parent=1 // pred_check_branch
      %59 = sbr.rel (0) target = $region61
    $region60: #{music_bart_forward.1} parent=1 // pred_region
      _
    $region61: #{music_bart_forward.1} parent=1 // pred_fallthru
      _
    // Predicated region
    $region62: #{music_bart_forward.1} parent=1 // pred_check
      _
    $region63: #{music_bart_forward.1} parent=1 // pred_check_branch
      %61 = sbr.rel (0) target = $region65
    $region64: #{music_bart_forward.1} parent=1 // pred_region
      _
    $region65: #{music_bart_forward.1} parent=1 // pred_fallthru
      _
    // Predicated region
    $region66: #{music_bart_forward.1} parent=1 // pred_check
      _
    $region67: #{music_bart_forward.1} parent=1 // pred_check_branch
      %63 = sbr.rel (0) target = $region69
    $region68: #{music_bart_forward.1} parent=1 // pred_region
      _
    $region69: #{music_bart_forward.1} parent=1 // pred_fallthru
      _
    // Predicated region
    $region70: #{music_bart_forward.1} parent=1 // pred_check
      _
    $region71: #{music_bart_forward.1} parent=1 // pred_check_branch
      %65 = sbr.rel (0) target = $region73
    $region72: #{music_bart_forward.1} parent=1 // pred_region
      _
    $region73: #{music_bart_forward.1} parent=1 // pred_fallthru
      _
    // Predicated region
    $region74: #{music_bart_forward.1} parent=1 // pred_check
      _
    $region75: #{music_bart_forward.1} parent=1 // pred_check_branch
      %67 = sbr.rel (0) target = $region77
    $region76: #{music_bart_forward.1} parent=1 // pred_region
      _
    $region77: #{music_bart_forward.1} parent=1 // pred_fallthru
      _
    // Predicated region
    $region78: #{music_bart_forward.1} parent=1 // pred_check
      _
    $region79: #{music_bart_forward.1} parent=1 // pred_check_branch
      %69 = sbr.rel (0) target = $region81
    $region80: #{music_bart_forward.1} parent=1 // pred_region
      _
    $region81: #{music_bart_forward.1} parent=1 // pred_fallthru
      _
    // Predicated region
    $region82: #{music_bart_forward.1} parent=1 // pred_check
      _
    $region83: #{music_bart_forward.1} parent=1 // pred_check_branch
      %71 = sbr.rel (0) target = $region85
    $region84: #{music_bart_forward.1} parent=1 // pred_region
      _
    $region85: #{music_bart_forward.1} parent=1 // pred_fallthru
      _
    %v73 = vld [vmem:[%s7] sm:$0xff]
    %v74 = vld [vmem:[%s7 + $0x8] sm:$0xff]
    %v75 = vld [vmem:[%s7 + $0x10] sm:$0xff]
    %v76 = vld [vmem:[%s7 + $0x18] sm:$0xff]
    %v77 = vld [vmem:[%s4] sm:$0xff]
    %v78 = vld [vmem:[%s4 + $0x8] sm:$0xff]
    %v79 = vld [vmem:[%s4 + $0x10] sm:$0xff]
    %v80 = vld [vmem:[%s4 + $0x18] sm:$0xff]
    %v81 = vld [vmem:[%s4 + $0x20] sm:$0xff]
    %v82 = vld [vmem:[%s4 + $0x28] sm:$0xff]
    %v83 = vld [vmem:[%s4 + $0x30] sm:$0xff]
    %v84 = vld [vmem:[%s4 + $0x38] sm:$0xff]
    %v85 = vld [vmem:[%s4 + $0x40] sm:$0xff]
    %v86 = vld [vmem:[%s4 + $0x48] sm:$0xff]
    %v87 = vld [vmem:[%s4 + $0x50] sm:$0xff]
    %v88 = vld [vmem:[%s4 + $0x58] sm:$0xff]
    %v89 = vld [vmem:[%s4 + $0x60] sm:$0xff]
    %v90 = vld [vmem:[%s4 + $0x68] sm:$0xff]
    %v91 = vld [vmem:[%s4 + $0x70] sm:$0xff]
    %v92 = vld [vmem:[%s4 + $0x78] sm:$0xff]
    %v93 = vld [vmem:[%s0] sm:$0xff]
    %v94 = vld [vmem:[%s0 + $0x8] sm:$0xff]
    %v95 = vld [vmem:[%s5] sm:$0xff]
    %v96 = vld [vmem:[%s5 + $0x8] sm:$0xff]
    %v97 = vlaneseq
    %v98 = vand.u32 %v97, 127
    %99 = vset.pattern.permute.xlu0 0
    %100 = vperm.xlu0 %99, %v93
    %v101 = vpop.permute.xlu0 %100
    %102 = vset.pattern.permute.xlu0 0
    %103 = vperm.xlu0 %102, %v94
    %v104 = vpop.permute.xlu0 %103
    %vm105 = vcmp.eq.s32.totalorder %v98, %v101
    %vm106 = vcmp.eq.s32.totalorder %v98, %v104
    %v107 = vsel %vm105, 1, 0
    %v108 = vsel %vm106, 1, 0
    %v109 = vcvt.s32.f32 %v107
    %v110 = vcvt.s32.f32 %v108
    %111 = vmatpush.msra.mxu0 %v92
    %112 = vmatpush.msra.mxu0 %v91
    %113 = vmatpush.msra.mxu0 %v90
    %114 = vmatpush.msra.mxu0 %v89
    %115 = vmatpush.msra.mxu0 %v88
    %116 = vmatpush.msra.mxu0 %v87
    %117 = vmatpush.msra.mxu0 %v86
    %118 = vmatpush.msra.mxu0 %v85
    %119 = vmatpush.msra.mxu0 %v84
    %120 = vmatpush.msra.mxu0 %v83
    %121 = vmatpush.msra.mxu0 %v82
    %122 = vmatpush.msra.mxu0 %v81
    %123 = vmatpush.msra.mxu0 %v80
    %124 = vmatpush.msra.mxu0 %v79
    %125 = vmatpush.msra.mxu0 %v78
    %126 = vmatpush.msra.mxu0 %v77
    %127 = vmatmul.f32.gmra.mxu0 %v109
    %v128 = vpop.f32.mrf.mxu0
    %v129 = vadd.f32 %v95, %v128
    %130 = vmatmul.f32.gmra.mxu0 %v110
    %v131 = vpop.f32.mrf.mxu0
    %v132 = vadd.f32 %v96, %v131
    %133 = vdwg.mxu0
    %vm134 = vcmask 261120
    %v135 = vsel %vm134, %v129, 0.0
    %136 = vadd.xlane.f32.xlu0 %v135
    %v137 = vpop.xlane.xlu0 %136
    %v138 = vsel %vm134, %v132, 0.0
    %139 = vadd.xlane.f32.xlu0 %v138
    %v140 = vpop.xlane.xlu0 %139
    %v141 = vrcp.pop 32.0
    %v142 = vmul.f32 32.0, %v141
    %v143 = vsub.f32 1.0, %v142
    %v144 = vmul.f32 %v141, %v143
    %v145 = vadd.f32 %v141, %v144
    %vm146 = vweird.f32 %v141
    %v147 = vsel %vm146, %v141, %v145
    %v148 = vmul.f32 %v137, %v147
    %v149 = vmul.f32 %v140, %v147
    %v150 = vsub.f32 %v129, %v148
    %v151 = vsub.f32 %v132, %v149
    %v152 = vmul.f32 %v150, %v150
    %v153 = vmul.f32 %v151, %v151
    %v154 = vsel %vm134, %v152, 0.0
    %155 = vadd.xlane.f32.xlu0 %v154
    %v156 = vpop.xlane.xlu0 %155
    %v157 = vsel %vm134, %v153, 0.0
    %158 = vadd.xlane.f32.xlu0 %v157
    %v159 = vpop.xlane.xlu0 %158
    %v160 = vmul.f32 %v156, %v147
    %v161 = vmul.f32 %v159, %v147
    %v162 = vadd.f32 %v160, 1e-05
    %v163 = vadd.f32 %v161, 1e-05
    %v164 = vrsqrt.pop %v162
    %v165 = vmul.f32 %v164, %v162
    %v166 = vmul.f32 %v165, %v164
    %v167 = vmul.f32 0.5, %v166
    %v168 = vsub.f32 1.5, %v167
    %v169 = vmul.f32 %v164, %v168
    %vm170 = vweird.f32 %v162
    %vm171 = vweird.f32 %v164
    %vm172 = vmor %vm170, %vm171
    %v173 = vsel %vm172, %v164, %v169
    %v174 = vrsqrt.pop %v163
    %v175 = vmul.f32 %v174, %v163
    %v176 = vmul.f32 %v175, %v174
    %v177 = vmul.f32 0.5, %v176
    %v178 = vsub.f32 1.5, %v177
    %v179 = vmul.f32 %v174, %v178
    %vm180 = vweird.f32 %v163
    %vm181 = vweird.f32 %v174
    %vm182 = vmor %vm180, %vm181
    %v183 = vsel %vm182, %v174, %v179
    %v184 = vmul.f32 %v150, %v173
    %v185 = vmul.f32 %v151, %v183
    %v186 = vperm.slane %v73, 0
    %v187 = vmul.f32 %v184, %v186
    %v188 = vmul.f32 %v185, %v186
    %v189 = vperm.slane %v73, 1
    %v190 = vadd.f32 %v187, %v189
    %v191 = vadd.f32 %v188, %v189
    %v192 = vld [vmem:[%s3] sm:$0x1]
    %vm193 = vcmp.gt.f32.partialorder %v192, 0.5
    %v194 = vlaneseq
    %v195 = vshrl.u32 %v194, 7
    %v196 = vadd.s32 %v195, 8
    %vm197 = vcmp.ge.s32.totalorder %v195, 0
    %vm198 = vcmp.ge.s32.totalorder %v196, 0
    %vm199 = vcmp.lt.s32.totalorder %v195, 8
    %vm200 = vcmp.lt.s32.totalorder %v196, 8
    %vm201 = vmand %vm197, %vm199
    %vm202 = vmand %vm198, %vm200
    %vm203 = vcmp.ge.s32.totalorder %v98, 0
    %vm204 = vmand %vm201, %vm203
    %vm205 = vmand %vm202, %vm203
    %vm206 = vcmp.lt.s32.totalorder %v98, 8
    %vm207 = vmand %vm204, %vm206
    %vm208 = vmand %vm205, %vm206
    %vm209 = vcmp.ge.s32.totalorder %v195, 8
    %vm210 = vcmp.ge.s32.totalorder %v196, 8
    %vm211 = vcmp.lt.s32.totalorder %v195, 16
    %vm212 = vcmp.lt.s32.totalorder %v196, 16
    %vm213 = vmand %vm209, %vm211
    %vm214 = vmand %vm210, %vm212
    %vm215 = vcmp.ge.s32.totalorder %v98, 8
    %vm216 = vmand %vm213, %vm215
    %vm217 = vmand %vm214, %vm215
    %vm218 = vcmp.lt.s32.totalorder %v98, 16
    %vm219 = vmand %vm216, %vm218
    %vm220 = vmand %vm217, %vm218
    %vm221 = vmor %vm207, %vm219
    %vm222 = vmor %vm208, %vm220
    %v223 = vsel %vm193, 1, 0
    %v224 = vperm.slane %v223, 0
    %vm225 = vcmp.eq.s32.totalorder %v224, 1
    %vm226 = vmand %vm221, %vm225
    %vm227 = vmand %vm222, %vm225
    %v228 = vld [vmem:[%s8] sm:$0xff]
    %v229 = vld [vmem:[%s8 + $0x8] sm:$0xff]
    %v230 = vld [vmem:[%s8 + $0x10] sm:$0xff]
    %v231 = vld [vmem:[%s8 + $0x18] sm:$0xff]
    %v232 = vld [vmem:[%s9] sm:$0xff]
    %v233 = vld [vmem:[%s9 + $0x8] sm:$0xff]
    %v234 = vld [vmem:[%s9 + $0x10] sm:$0xff]
    %v235 = vld [vmem:[%s9 + $0x18] sm:$0xff]
    %v236 = vld [vmem:[%s10] sm:$0xff]
    %v237 = vld [vmem:[%s10 + $0x8] sm:$0xff]
    %v238 = vld [vmem:[%s10 + $0x10] sm:$0xff]
    %v239 = vld [vmem:[%s10 + $0x18] sm:$0xff]
    %v240 = vpack.c.bf16 %v191, %v190
    %v241 = vpack.c.bf16 %v229, %v228
    %v242 = vpack.c.bf16 %v231, %v230
    %v243 = vperm.slane %v73, 4
    %v245 = vsel %vm134, %v240, 0
    %247 = vmatpush.bf16.msra.mxu0 0
    %248 = vmatpush.bf16.msra.mxu0 0
    %249 = vmatpush.bf16.msra.mxu0 0
    %250 = vmatpush.bf16.msra.mxu0 0
    %251 = vmatpush.bf16.msra.mxu0 0
    %252 = vmatpush.bf16.msra.mxu0 0
    %253 = vmatpush.bf16.msra.mxu0 %v242
    %254 = vmatpush.bf16.msra.mxu0 %v241
    %255 = vmatmul.bf16.gmra.mxu0 %v245
    %v256 = vpop.f32.mrf.mxu0
    %v257 = vadd.f32 %v243, %v256
    %v258 = vpop.f32.mrf.mxu0
    %v259 = vadd.f32 %v243, %v258
    %260 = vdwg.mxu0
    %v261 = vpack.c.bf16 %v233, %v232
    %v262 = vpack.c.bf16 %v235, %v234
    %v263 = vperm.slane %v73, 5
    %264 = vmatpush.bf16.msra.mxu0 0
    %265 = vmatpush.bf16.msra.mxu0 0
    %266 = vmatpush.bf16.msra.mxu0 0
    %267 = vmatpush.bf16.msra.mxu0 0
    %268 = vmatpush.bf16.msra.mxu0 0
    %269 = vmatpush.bf16.msra.mxu0 0
    %270 = vmatpush.bf16.msra.mxu0 %v262
    %271 = vmatpush.bf16.msra.mxu0 %v261
    %272 = vmatmul.bf16.gmra.mxu0 %v245
    %v273 = vpop.f32.mrf.mxu0
    %v274 = vadd.f32 %v263, %v273
    %v275 = vpop.f32.mrf.mxu0
    %v276 = vadd.f32 %v263, %v275
    %277 = vdwg.mxu0
    %v278 = vsel %vm226, 0.0, -1e+09
    %v279 = vsel %vm227, 0.0, -1e+09
    %v280 = vpack.c.bf16 %v259, %v257
    %v281 = vpack.c.bf16 %v276, %v274
    %vm282 = vcmask 130048
    %v284 = vsel %vm282, %v280, 0
    %v287 = vsel %vm282, %v281, 0
    %289 = vmatpush.bf16.xpose.msra.mxu0 0
    %290 = vmatpush.bf16.xpose.msra.mxu0 0
    %291 = vmatpush.bf16.xpose.msra.mxu0 0
    %292 = vmatpush.bf16.xpose.msra.mxu0 0
    %293 = vmatpush.bf16.xpose.msra.mxu0 0
    %294 = vmatpush.bf16.xpose.msra.mxu0 0
    %295 = vmatpush.bf16.xpose.msra.mxu0 0
    %296 = vmatpush.bf16.xpose.msra.mxu0 %v287
    %297 = vmatmul.bf16.gmra.mxu0 %v284
    %v298 = vpop.f32.mrf.mxu0
    %v299 = vadd.f32 0.0, %v298
    %v300 = vpop.f32.mrf.mxu0
    %v301 = vadd.f32 0.0, %v300
    %302 = vdwg.mxu0
    %v303 = vmul.f32 %v299, 0.25
    %v304 = vmul.f32 %v301, 0.25
    %v305 = vadd.f32 %v303, %v278
    %v306 = vadd.f32 %v304, %v279
    %v307 = vsel %vm282, %v305, -inf
    %308 = vmax.xlane.f32.xlu0 %v307
    %v309 = vpop.xlane.xlu0 %308
    %v310 = vsel %vm282, %v306, -inf
    %311 = vmax.xlane.f32.xlu0 %v310
    %v312 = vpop.xlane.xlu0 %311
    %v313 = vsub.f32 %v305, %v309
    %v314 = vsub.f32 %v306, %v312
    %v315 = vmul.f32 %v313, 1.442695
    %v316 = vpow.pop %v315
    %v317 = vmul.f32 %v314, 1.442695
    %v318 = vpow.pop %v317
    %v319 = vsel %vm282, %v316, 0.0
    %320 = vadd.xlane.f32.xlu0 %v319
    %v321 = vpop.xlane.xlu0 %320
    %v322 = vsel %vm282, %v318, 0.0
    %323 = vadd.xlane.f32.xlu0 %v322
    %v324 = vpop.xlane.xlu0 %323
    %v325 = vrcp.pop %v321
    %v326 = vrcp.pop %v324
    %v327 = vmul.f32 %v316, %v325
    %v328 = vmul.f32 %v318, %v326
    %v329 = vpack.c.bf16 %v328, %v327
    %331 = vrot.lane.b32.xlu0 %v281, 96
    %v332 = vpop.permute.xlu0 %331
    %v335 = vsel %vm282, %v329, 0
    %337 = vmatpush.bf16.msra.mxu0 0
    %338 = vmatpush.bf16.msra.mxu0 0
    %339 = vmatpush.bf16.msra.mxu0 0
    %340 = vmatpush.bf16.msra.mxu0 0
    %341 = vmatpush.bf16.msra.mxu0 0
    %342 = vmatpush.bf16.msra.mxu0 0
    %343 = vmatpush.bf16.msra.mxu0 0
    %344 = vmatpush.bf16.msra.mxu0 %v332
    %345 = vmatmul.bf16.gmra.mxu0 %v335
    %v346 = vpop.f32.mrf.mxu0
    %v347 = vadd.f32 0.0, %v346
    %v348 = vpop.f32.mrf.mxu0
    %v349 = vadd.f32 0.0, %v348
    %350 = vdwg.mxu0
    %v351 = vpack.c.bf16 %v349, %v347
    %v352 = vpack.c.bf16 %v237, %v236
    %354 = vrot.lane.b32.xlu0 %v280, 112
    %v355 = vpop.permute.xlu0 %354
    %356 = vrot.lane.b32.xlu0 %v281, 112
    %v357 = vpop.permute.xlu0 %356
    %v359 = vsel %vm282, %v355, 0
    %v362 = vsel %vm282, %v357, 0
    %364 = vmatpush.bf16.xpose.msra.mxu0 0
    %365 = vmatpush.bf16.xpose.msra.mxu0 0
    %366 = vmatpush.bf16.xpose.msra.mxu0 0
    %367 = vmatpush.bf16.xpose.msra.mxu0 0
    %368 = vmatpush.bf16.xpose.msra.mxu0 0
    %369 = vmatpush.bf16.xpose.msra.mxu0 0
    %370 = vmatpush.bf16.xpose.msra.mxu0 0
    %371 = vmatpush.bf16.xpose.msra.mxu0 %v362
    %372 = vmatmul.bf16.gmra.mxu0 %v359
    %v373 = vpop.f32.mrf.mxu0
    %v374 = vadd.f32 0.0, %v373
    %v375 = vpop.f32.mrf.mxu0
    %v376 = vadd.f32 0.0, %v375
    %377 = vdwg.mxu0
    %v378 = vmul.f32 %v374, 0.25
    %v379 = vmul.f32 %v376, 0.25
    %v380 = vadd.f32 %v378, %v278
    %v381 = vadd.f32 %v379, %v279
    %v382 = vsel %vm282, %v380, -inf
    %383 = vmax.xlane.f32.xlu0 %v382
    %v384 = vpop.xlane.xlu0 %383
    %v385 = vsel %vm282, %v381, -inf
    %386 = vmax.xlane.f32.xlu0 %v385
    %v387 = vpop.xlane.xlu0 %386
    %v388 = vsub.f32 %v380, %v384
    %v389 = vsub.f32 %v381, %v387
    %v390 = vmul.f32 %v388, 1.442695
    %v391 = vpow.pop %v390
    %v392 = vmul.f32 %v389, 1.442695
    %v393 = vpow.pop %v392
    %v394 = vsel %vm282, %v391, 0.0
    %395 = vadd.xlane.f32.xlu0 %v394
    %v396 = vpop.xlane.xlu0 %395
    %v397 = vsel %vm282, %v393, 0.0
    %398 = vadd.xlane.f32.xlu0 %v397
    %v399 = vpop.xlane.xlu0 %398
    %v400 = vrcp.pop %v396
    %v401 = vrcp.pop %v399
    %v402 = vmul.f32 %v391, %v400
    %v403 = vmul.f32 %v393, %v401
    %v404 = vpack.c.bf16 %v403, %v402
    %405 = vrot.lane.b32.xlu0 %v281, 80
    %v406 = vpop.permute.xlu0 %405
    %v409 = vsel %vm282, %v404, 0
    %411 = vmatpush.bf16.msra.mxu0 0
    %412 = vmatpush.bf16.msra.mxu0 0
    %413 = vmatpush.bf16.msra.mxu0 0
    %414 = vmatpush.bf16.msra.mxu0 0
    %415 = vmatpush.bf16.msra.mxu0 0
    %416 = vmatpush.bf16.msra.mxu0 0
    %417 = vmatpush.bf16.msra.mxu0 0
    %418 = vmatpush.bf16.msra.mxu0 %v406
    %419 = vmatmul.bf16.gmra.mxu0 %v409
    %v420 = vpop.f32.mrf.mxu0
    %v421 = vadd.f32 0.0, %v420
    %v422 = vpop.f32.mrf.mxu0
    %v423 = vadd.f32 0.0, %v422
    %424 = vdwg.mxu0
    %v425 = vpack.c.bf16 %v423, %v421
    %v426 = vpack.c.bf16 %v239, %v238
    %v428 = vsel %vm282, %v425, 0
    %430 = vmatpush.bf16.msra.mxu0 0
    %431 = vmatpush.bf16.msra.mxu0 0
    %432 = vmatpush.bf16.msra.mxu0 0
    %433 = vmatpush.bf16.msra.mxu0 0
    %434 = vmatpush.bf16.msra.mxu0 0
    %435 = vmatpush.bf16.msra.mxu0 0
    %436 = vmatpush.bf16.msra.mxu0 0
    %437 = vmatpush.bf16.msra.mxu0 %v426
    %438 = vmatmul.bf16.gmra.mxu0 %v428
    %v439 = vpop.f32.mrf.mxu0
    %v440 = vadd.f32 0.0, %v439
    %v441 = vpop.f32.mrf.mxu0
    %v442 = vadd.f32 0.0, %v441
    %443 = vdwg.mxu0
    %v445 = vsel %vm282, %v351, 0
    %447 = vmatpush.bf16.msra.mxu0 0
    %448 = vmatpush.bf16.msra.mxu0 0
    %449 = vmatpush.bf16.msra.mxu0 0
    %450 = vmatpush.bf16.msra.mxu0 0
    %451 = vmatpush.bf16.msra.mxu0 0
    %452 = vmatpush.bf16.msra.mxu0 0
    %453 = vmatpush.bf16.msra.mxu0 0
    %454 = vmatpush.bf16.msra.mxu0 %v352
    %455 = vmatmul.bf16.gmra.mxu0 %v445
    %v456 = vpop.f32.mrf.mxu0
    %v457 = vadd.f32 %v440, %v456
    %v458 = vpop.f32.mrf.mxu0
    %v459 = vadd.f32 %v442, %v458
    %460 = vdwg.mxu0
    %v461 = vperm.slane %v73, 6
    %v462 = vadd.f32 %v457, %v461
    %v463 = vadd.f32 %v459, %v461
    %v464 = vadd.f32 %v462, %v190
    %v465 = vadd.f32 %v463, %v191
    %v466 = vsel %vm134, %v464, 0.0
    %467 = vadd.xlane.f32.xlu0 %v466
    %v468 = vpop.xlane.xlu0 %467
    %v469 = vsel %vm134, %v465, 0.0
    %470 = vadd.xlane.f32.xlu0 %v469
    %v471 = vpop.xlane.xlu0 %470
    %v472 = vmul.f32 %v468, %v147
    %v473 = vmul.f32 %v471, %v147
    %v474 = vsub.f32 %v464, %v472
    %v475 = vsub.f32 %v465, %v473
    %v476 = vmul.f32 %v474, %v474
    %v477 = vmul.f32 %v475, %v475
    %v478 = vsel %vm134, %v476, 0.0
    %479 = vadd.xlane.f32.xlu0 %v478
    %v480 = vpop.xlane.xlu0 %479
    %v481 = vsel %vm134, %v477, 0.0
    %482 = vadd.xlane.f32.xlu0 %v481
    %v483 = vpop.xlane.xlu0 %482
    %v484 = vmul.f32 %v480, %v147
    %v485 = vmul.f32 %v483, %v147
    %v486 = vadd.f32 %v484, 1e-05
    %v487 = vadd.f32 %v485, 1e-05
    %v488 = vrsqrt.pop %v486
    %v489 = vmul.f32 %v488, %v486
    %v490 = vmul.f32 %v489, %v488
    %v491 = vmul.f32 0.5, %v490
    %v492 = vsub.f32 1.5, %v491
    %v493 = vmul.f32 %v488, %v492
    %vm494 = vweird.f32 %v486
    %vm495 = vweird.f32 %v488
    %vm496 = vmor %vm494, %vm495
    %v497 = vsel %vm496, %v488, %v493
    %v498 = vrsqrt.pop %v487
    %v499 = vmul.f32 %v498, %v487
    %v500 = vmul.f32 %v499, %v498
    %v501 = vmul.f32 0.5, %v500
    %v502 = vsub.f32 1.5, %v501
    %v503 = vmul.f32 %v498, %v502
    %vm504 = vweird.f32 %v487
    %vm505 = vweird.f32 %v498
    %vm506 = vmor %vm504, %vm505
    %v507 = vsel %vm506, %v498, %v503
    %v508 = vmul.f32 %v474, %v497
    %v509 = vmul.f32 %v475, %v507
    %v510 = vperm.slane %v73, 7
    %v511 = vmul.f32 %v508, %v510
    %v512 = vmul.f32 %v509, %v510
    %v513 = vperm.slane %v74, 0
    %v514 = vadd.f32 %v511, %v513
    %v515 = vadd.f32 %v512, %v513
    %v516 = vld [vmem:[%s11] sm:$0xff]
    %v517 = vld [vmem:[%s11 + $0x8] sm:$0xff]
    %v518 = vld [vmem:[%s11 + $0x10] sm:$0xff]
    %v519 = vld [vmem:[%s11 + $0x18] sm:$0xff]
    %v520 = vld [vmem:[%s12] sm:$0xff]
    %v521 = vld [vmem:[%s12 + $0x8] sm:$0xff]
    %v522 = vld [vmem:[%s12 + $0x10] sm:$0xff]
    %v523 = vld [vmem:[%s12 + $0x18] sm:$0xff]
    %v524 = vld [vmem:[%s12 + $0x20] sm:$0xff]
    %v525 = vld [vmem:[%s12 + $0x28] sm:$0xff]
    %v526 = vld [vmem:[%s12 + $0x30] sm:$0xff]
    %v527 = vld [vmem:[%s12 + $0x38] sm:$0xff]
    %v528 = vpack.c.bf16 %v515, %v514
    %v529 = vpack.c.bf16 %v517, %v516
    %v530 = vpack.c.bf16 %v519, %v518
    %v531 = vperm.slane %v74, 1
    %v533 = vsel %vm134, %v528, 0
    %535 = vmatpush.bf16.msra.mxu0 0
    %536 = vmatpush.bf16.msra.mxu0 0
    %537 = vmatpush.bf16.msra.mxu0 0
    %538 = vmatpush.bf16.msra.mxu0 0
    %539 = vmatpush.bf16.msra.mxu0 0
    %540 = vmatpush.bf16.msra.mxu0 0
    %541 = vmatpush.bf16.msra.mxu0 %v530
    %542 = vmatpush.bf16.msra.mxu0 %v529
    %543 = vmatmul.bf16.gmra.mxu0 %v533
    %v544 = vpop.f32.mrf.mxu0
    %v545 = vadd.f32 %v531, %v544
    %v546 = vpop.f32.mrf.mxu0
    %v547 = vadd.f32 %v531, %v546
    %548 = vdwg.mxu0
    %v549 = vmul.f32 %v545, %v545
    %v550 = vmul.f32 %v547, %v547
    %v551 = vmul.f32 %v545, %v549
    %v552 = vmul.f32 %v547, %v550
    %v553 = vmul.f32 %v551, 0.044715
    %v554 = vmul.f32 %v552, 0.044715
    %v555 = vadd.f32 %v545, %v553
    %v556 = vadd.f32 %v547, %v554
    %v557 = vmul.f32 %v555, 0.7978846
    %v558 = vmul.f32 %v556, 0.7978846
    %v559 = vtanh.pop %v557
    %v560 = vtanh.pop %v558
    %v561 = vadd.f32 %v559, 1.0
    %v562 = vadd.f32 %v560, 1.0
    %v563 = vmul.f32 %v561, 0.5
    %v564 = vmul.f32 %v562, 0.5
    %v565 = vmul.f32 %v545, %v563
    %v566 = vmul.f32 %v547, %v564
    %v567 = vpack.c.bf16 %v566, %v565
    %v568 = vpack.c.bf16 %v521, %v520
    %v569 = vpack.c.bf16 %v523, %v522
    %v570 = vpack.c.bf16 %v525, %v524
    %v571 = vpack.c.bf16 %v527, %v526
    %v572 = vperm.slane %v74, 2
    %vm573 = vcmask 523264
    %v575 = vsel %vm573, %v567, 0
    %577 = vmatpush.bf16.msra.mxu0 0
    %578 = vmatpush.bf16.msra.mxu0 0
    %579 = vmatpush.bf16.msra.mxu0 0
    %580 = vmatpush.bf16.msra.mxu0 0
    %581 = vmatpush.bf16.msra.mxu0 %v571
    %582 = vmatpush.bf16.msra.mxu0 %v570
    %583 = vmatpush.bf16.msra.mxu0 %v569
    %584 = vmatpush.bf16.msra.mxu0 %v568
    %585 = vmatmul.bf16.gmra.mxu0 %v575
    %v586 = vpop.f32.mrf.mxu0
    %v587 = vadd.f32 %v572, %v586
    %v588 = vpop.f32.mrf.mxu0
    %v589 = vadd.f32 %v572, %v588
    %590 = vdwg.mxu0
    %v591 = vadd.f32 %v587, %v514
    %v592 = vadd.f32 %v589, %v515
    %v593 = vsel %vm134, %v591, 0.0
    %594 = vadd.xlane.f32.xlu0 %v593
    %v595 = vpop.xlane.xlu0 %594
    %v596 = vsel %vm134, %v592, 0.0
    %597 = vadd.xlane.f32.xlu0 %v596
    %v598 = vpop.xlane.xlu0 %597
    %v599 = vmul.f32 %v595, %v147
    %v600 = vmul.f32 %v598, %v147
    %v601 = vsub.f32 %v591, %v599
    %v602 = vsub.f32 %v592, %v600
    %v603 = vmul.f32 %v601, %v601
    %v604 = vmul.f32 %v602, %v602
    %v605 = vsel %vm134, %v603, 0.0
    %606 = vadd.xlane.f32.xlu0 %v605
    %v607 = vpop.xlane.xlu0 %606
    %v608 = vsel %vm134, %v604, 0.0
    %609 = vadd.xlane.f32.xlu0 %v608
    %v610 = vpop.xlane.xlu0 %609
    %v611 = vmul.f32 %v607, %v147
    %v612 = vmul.f32 %v610, %v147
    %v613 = vadd.f32 %v611, 1e-05
    %v614 = vadd.f32 %v612, 1e-05
    %v615 = vrsqrt.pop %v613
    %v616 = vmul.f32 %v615, %v613
    %v617 = vmul.f32 %v616, %v615
    %v618 = vmul.f32 0.5, %v617
    %v619 = vsub.f32 1.5, %v618
    %v620 = vmul.f32 %v615, %v619
    %vm621 = vweird.f32 %v613
    %vm622 = vweird.f32 %v615
    %vm623 = vmor %vm621, %vm622
    %v624 = vsel %vm623, %v615, %v620
    %v625 = vrsqrt.pop %v614
    %v626 = vmul.f32 %v625, %v614
    %v627 = vmul.f32 %v626, %v625
    %v628 = vmul.f32 0.5, %v627
    %v629 = vsub.f32 1.5, %v628
    %v630 = vmul.f32 %v625, %v629
    %vm631 = vweird.f32 %v614
    %vm632 = vweird.f32 %v625
    %vm633 = vmor %vm631, %vm632
    %v634 = vsel %vm633, %v625, %v630
    %v635 = vmul.f32 %v601, %v624
    %v636 = vmul.f32 %v602, %v634
    %v637 = vperm.slane %v74, 3
    %v638 = vmul.f32 %v635, %v637
    %v639 = vmul.f32 %v636, %v637
    %v640 = vperm.slane %v74, 4
    %v641 = vadd.f32 %v638, %v640
    %v642 = vadd.f32 %v639, %v640
    %v643 = vld [vmem:[%s1] sm:$0xff]
    %v644 = vld [vmem:[%s1 + $0x8] sm:$0xff]
    %v645 = vld [vmem:[%s6] sm:$0xff]
    %v646 = vld [vmem:[%s6 + $0x8] sm:$0xff]
    %647 = vset.pattern.permute.xlu0 0
    %648 = vperm.xlu0 %647, %v643
    %v649 = vpop.permute.xlu0 %648
    %650 = vset.pattern.permute.xlu0 0
    %651 = vperm.xlu0 %650, %v644
    %v652 = vpop.permute.xlu0 %651
    %vm653 = vcmp.eq.s32.totalorder %v98, %v649
    %vm654 = vcmp.eq.s32.totalorder %v98, %v652
    %v655 = vsel %vm653, 1, 0
    %v656 = vsel %vm654, 1, 0
    %v657 = vcvt.s32.f32 %v655
    %v658 = vcvt.s32.f32 %v656
    %659 = vmatpush.msra.mxu0 %v92
    %660 = vmatpush.msra.mxu0 %v91
    %661 = vmatpush.msra.mxu0 %v90
    %662 = vmatpush.msra.mxu0 %v89
    %663 = vmatpush.msra.mxu0 %v88
    %664 = vmatpush.msra.mxu0 %v87
    %665 = vmatpush.msra.mxu0 %v86
    %666 = vmatpush.msra.mxu0 %v85
    %667 = vmatpush.msra.mxu0 %v84
    %668 = vmatpush.msra.mxu0 %v83
    %669 = vmatpush.msra.mxu0 %v82
    %670 = vmatpush.msra.mxu0 %v81
    %671 = vmatpush.msra.mxu0 %v80
    %672 = vmatpush.msra.mxu0 %v79
    %673 = vmatpush.msra.mxu0 %v78
    %674 = vmatpush.msra.mxu0 %v77
    %675 = vmatmul.f32.gmra.mxu0 %v657
    %v676 = vpop.f32.mrf.mxu0
    %v677 = vadd.f32 %v645, %v676
    %678 = vmatmul.f32.gmra.mxu0 %v658
    %v679 = vpop.f32.mrf.mxu0
    %v680 = vadd.f32 %v646, %v679
    %681 = vdwg.mxu0
    %v682 = vsel %vm134, %v677, 0.0
    %683 = vadd.xlane.f32.xlu0 %v682
    %v684 = vpop.xlane.xlu0 %683
    %v685 = vsel %vm134, %v680, 0.0
    %686 = vadd.xlane.f32.xlu0 %v685
    %v687 = vpop.xlane.xlu0 %686
    %v688 = vmul.f32 %v684, %v147
    %v689 = vmul.f32 %v687, %v147
    %v690 = vsub.f32 %v677, %v688
    %v691 = vsub.f32 %v680, %v689
    %v692 = vmul.f32 %v690, %v690
    %v693 = vmul.f32 %v691, %v691
    %v694 = vsel %vm134, %v692, 0.0
    %695 = vadd.xlane.f32.xlu0 %v694
    %v696 = vpop.xlane.xlu0 %695
    %v697 = vsel %vm134, %v693, 0.0
    %698 = vadd.xlane.f32.xlu0 %v697
    %v699 = vpop.xlane.xlu0 %698
    %v700 = vmul.f32 %v696, %v147
    %v701 = vmul.f32 %v699, %v147
    %v702 = vadd.f32 %v700, 1e-05
    %v703 = vadd.f32 %v701, 1e-05
    %v704 = vrsqrt.pop %v702
    %v705 = vmul.f32 %v704, %v702
    %v706 = vmul.f32 %v705, %v704
    %v707 = vmul.f32 0.5, %v706
    %v708 = vsub.f32 1.5, %v707
    %v709 = vmul.f32 %v704, %v708
    %vm710 = vweird.f32 %v702
    %vm711 = vweird.f32 %v704
    %vm712 = vmor %vm710, %vm711
    %v713 = vsel %vm712, %v704, %v709
    %v714 = vrsqrt.pop %v703
    %v715 = vmul.f32 %v714, %v703
    %v716 = vmul.f32 %v715, %v714
    %v717 = vmul.f32 0.5, %v716
    %v718 = vsub.f32 1.5, %v717
    %v719 = vmul.f32 %v714, %v718
    %vm720 = vweird.f32 %v703
    %vm721 = vweird.f32 %v714
    %vm722 = vmor %vm720, %vm721
    %v723 = vsel %vm722, %v714, %v719
    %v724 = vmul.f32 %v690, %v713
    %v725 = vmul.f32 %v691, %v723
    %v726 = vperm.slane %v73, 2
    %v727 = vmul.f32 %v724, %v726
    %v728 = vmul.f32 %v725, %v726
    %v729 = vperm.slane %v73, 3
    %v730 = vadd.f32 %v727, %v729
    %v731 = vadd.f32 %v728, %v729
    %vm732 = vcmp.ge.s32.totalorder %v195, %v98
    %vm733 = vcmp.ge.s32.totalorder %v196, %v98
    %vm734 = vmand %vm221, %vm732
    %vm735 = vmand %vm222, %vm733
    %v736 = vld [vmem:[%s13] sm:$0xff]
    %v737 = vld [vmem:[%s13 + $0x8] sm:$0xff]
    %v738 = vld [vmem:[%s13 + $0x10] sm:$0xff]
    %v739 = vld [vmem:[%s13 + $0x18] sm:$0xff]
    %v740 = vld [vmem:[%s14] sm:$0xff]
    %v741 = vld [vmem:[%s14 + $0x8] sm:$0xff]
    %v742 = vld [vmem:[%s14 + $0x10] sm:$0xff]
    %v743 = vld [vmem:[%s14 + $0x18] sm:$0xff]
    %v744 = vld [vmem:[%s15] sm:$0xff]
    %v745 = vld [vmem:[%s15 + $0x8] sm:$0xff]
    %v746 = vld [vmem:[%s15 + $0x10] sm:$0xff]
    %v747 = vld [vmem:[%s15 + $0x18] sm:$0xff]
    %v748 = vpack.c.bf16 %v731, %v730
    %v749 = vpack.c.bf16 %v737, %v736
    %v750 = vpack.c.bf16 %v739, %v738
    %v751 = vperm.slane %v74, 5
    %v753 = vsel %vm134, %v748, 0
    %755 = vmatpush.bf16.msra.mxu0 0
    %756 = vmatpush.bf16.msra.mxu0 0
    %757 = vmatpush.bf16.msra.mxu0 0
    %758 = vmatpush.bf16.msra.mxu0 0
    %759 = vmatpush.bf16.msra.mxu0 0
    %760 = vmatpush.bf16.msra.mxu0 0
    %761 = vmatpush.bf16.msra.mxu0 %v750
    %762 = vmatpush.bf16.msra.mxu0 %v749
    %763 = vmatmul.bf16.gmra.mxu0 %v753
    %v764 = vpop.f32.mrf.mxu0
    %v765 = vadd.f32 %v751, %v764
    %v766 = vpop.f32.mrf.mxu0
    %v767 = vadd.f32 %v751, %v766
    %768 = vdwg.mxu0
    %v769 = vpack.c.bf16 %v741, %v740
    %v770 = vpack.c.bf16 %v743, %v742
    %v771 = vperm.slane %v74, 6
    %772 = vmatpush.bf16.msra.mxu0 0
    %773 = vmatpush.bf16.msra.mxu0 0
    %774 = vmatpush.bf16.msra.mxu0 0
    %775 = vmatpush.bf16.msra.mxu0 0
    %776 = vmatpush.bf16.msra.mxu0 0
    %777 = vmatpush.bf16.msra.mxu0 0
    %778 = vmatpush.bf16.msra.mxu0 %v770
    %779 = vmatpush.bf16.msra.mxu0 %v769
    %780 = vmatmul.bf16.gmra.mxu0 %v753
    %v781 = vpop.f32.mrf.mxu0
    %v782 = vadd.f32 %v771, %v781
    %v783 = vpop.f32.mrf.mxu0
    %v784 = vadd.f32 %v771, %v783
    %785 = vdwg.mxu0
    %v786 = vsel %vm734, 0.0, -1e+09
    %v787 = vsel %vm735, 0.0, -1e+09
    %v788 = vpack.c.bf16 %v767, %v765
    %v789 = vpack.c.bf16 %v784, %v782
    %v791 = vsel %vm282, %v788, 0
    %v794 = vsel %vm282, %v789, 0
    %796 = vmatpush.bf16.xpose.msra.mxu0 0
    %797 = vmatpush.bf16.xpose.msra.mxu0 0
    %798 = vmatpush.bf16.xpose.msra.mxu0 0
    %799 = vmatpush.bf16.xpose.msra.mxu0 0
    %800 = vmatpush.bf16.xpose.msra.mxu0 0
    %801 = vmatpush.bf16.xpose.msra.mxu0 0
    %802 = vmatpush.bf16.xpose.msra.mxu0 0
    %803 = vmatpush.bf16.xpose.msra.mxu0 %v794
    %804 = vmatmul.bf16.gmra.mxu0 %v791
    %v805 = vpop.f32.mrf.mxu0
    %v806 = vadd.f32 0.0, %v805
    %v807 = vpop.f32.mrf.mxu0
    %v808 = vadd.f32 0.0, %v807
    %809 = vdwg.mxu0
    %v810 = vmul.f32 %v806, 0.25
    %v811 = vmul.f32 %v808, 0.25
    %v812 = vadd.f32 %v810, %v786
    %v813 = vadd.f32 %v811, %v787
    %v814 = vsel %vm282, %v812, -inf
    %815 = vmax.xlane.f32.xlu0 %v814
    %v816 = vpop.xlane.xlu0 %815
    %v817 = vsel %vm282, %v813, -inf
    %818 = vmax.xlane.f32.xlu0 %v817
    %v819 = vpop.xlane.xlu0 %818
    %v820 = vsub.f32 %v812, %v816
    %v821 = vsub.f32 %v813, %v819
    %v822 = vmul.f32 %v820, 1.442695
    %v823 = vpow.pop %v822
    %v824 = vmul.f32 %v821, 1.442695
    %v825 = vpow.pop %v824
    %v826 = vsel %vm282, %v823, 0.0
    %827 = vadd.xlane.f32.xlu0 %v826
    %v828 = vpop.xlane.xlu0 %827
    %v829 = vsel %vm282, %v825, 0.0
    %830 = vadd.xlane.f32.xlu0 %v829
    %v831 = vpop.xlane.xlu0 %830
    %v832 = vrcp.pop %v828
    %v833 = vrcp.pop %v831
    %v834 = vmul.f32 %v823, %v832
    %v835 = vmul.f32 %v825, %v833
    %v836 = vpack.c.bf16 %v835, %v834
    %838 = vrot.lane.b32.xlu0 %v789, 96
    %v839 = vpop.permute.xlu0 %838
    %v842 = vsel %vm282, %v836, 0
    %844 = vmatpush.bf16.msra.mxu0 0
    %845 = vmatpush.bf16.msra.mxu0 0
    %846 = vmatpush.bf16.msra.mxu0 0
    %847 = vmatpush.bf16.msra.mxu0 0
    %848 = vmatpush.bf16.msra.mxu0 0
    %849 = vmatpush.bf16.msra.mxu0 0
    %850 = vmatpush.bf16.msra.mxu0 0
    %851 = vmatpush.bf16.msra.mxu0 %v839
    %852 = vmatmul.bf16.gmra.mxu0 %v842
    %v853 = vpop.f32.mrf.mxu0
    %v854 = vadd.f32 0.0, %v853
    %v855 = vpop.f32.mrf.mxu0
    %v856 = vadd.f32 0.0, %v855
    %857 = vdwg.mxu0
    %v858 = vpack.c.bf16 %v856, %v854
    %v859 = vpack.c.bf16 %v745, %v744
    %861 = vrot.lane.b32.xlu0 %v788, 112
    %v862 = vpop.permute.xlu0 %861
    %863 = vrot.lane.b32.xlu0 %v789, 112
    %v864 = vpop.permute.xlu0 %863
    %v866 = vsel %vm282, %v862, 0
    %v869 = vsel %vm282, %v864, 0
    %871 = vmatpush.bf16.xpose.msra.mxu0 0
    %872 = vmatpush.bf16.xpose.msra.mxu0 0
    %873 = vmatpush.bf16.xpose.msra.mxu0 0
    %874 = vmatpush.bf16.xpose.msra.mxu0 0
    %875 = vmatpush.bf16.xpose.msra.mxu0 0
    %876 = vmatpush.bf16.xpose.msra.mxu0 0
    %877 = vmatpush.bf16.xpose.msra.mxu0 0
    %878 = vmatpush.bf16.xpose.msra.mxu0 %v869
    %879 = vmatmul.bf16.gmra.mxu0 %v866
    %v880 = vpop.f32.mrf.mxu0
    %v881 = vadd.f32 0.0, %v880
    %v882 = vpop.f32.mrf.mxu0
    %v883 = vadd.f32 0.0, %v882
    %884 = vdwg.mxu0
    %v885 = vmul.f32 %v881, 0.25
    %v886 = vmul.f32 %v883, 0.25
    %v887 = vadd.f32 %v885, %v786
    %v888 = vadd.f32 %v886, %v787
    %v889 = vsel %vm282, %v887, -inf
    %890 = vmax.xlane.f32.xlu0 %v889
    %v891 = vpop.xlane.xlu0 %890
    %v892 = vsel %vm282, %v888, -inf
    %893 = vmax.xlane.f32.xlu0 %v892
    %v894 = vpop.xlane.xlu0 %893
    %v895 = vsub.f32 %v887, %v891
    %v896 = vsub.f32 %v888, %v894
    %v897 = vmul.f32 %v895, 1.442695
    %v898 = vpow.pop %v897
    %v899 = vmul.f32 %v896, 1.442695
    %v900 = vpow.pop %v899
    %v901 = vsel %vm282, %v898, 0.0
    %902 = vadd.xlane.f32.xlu0 %v901
    %v903 = vpop.xlane.xlu0 %902
    %v904 = vsel %vm282, %v900, 0.0
    %905 = vadd.xlane.f32.xlu0 %v904
    %v906 = vpop.xlane.xlu0 %905
    %v907 = vrcp.pop %v903
    %v908 = vrcp.pop %v906
    %v909 = vmul.f32 %v898, %v907
    %v910 = vmul.f32 %v900, %v908
    %v911 = vpack.c.bf16 %v910, %v909
    %912 = vrot.lane.b32.xlu0 %v789, 80
    %v913 = vpop.permute.xlu0 %912
    %v916 = vsel %vm282, %v911, 0
    %918 = vmatpush.bf16.msra.mxu0 0
    %919 = vmatpush.bf16.msra.mxu0 0
    %920 = vmatpush.bf16.msra.mxu0 0
    %921 = vmatpush.bf16.msra.mxu0 0
    %922 = vmatpush.bf16.msra.mxu0 0
    %923 = vmatpush.bf16.msra.mxu0 0
    %924 = vmatpush.bf16.msra.mxu0 0
    %925 = vmatpush.bf16.msra.mxu0 %v913
    %926 = vmatmul.bf16.gmra.mxu0 %v916
    %v927 = vpop.f32.mrf.mxu0
    %v928 = vadd.f32 0.0, %v927
    %v929 = vpop.f32.mrf.mxu0
    %v930 = vadd.f32 0.0, %v929
    %931 = vdwg.mxu0
    %v932 = vpack.c.bf16 %v930, %v928
    %v933 = vpack.c.bf16 %v747, %v746
    %v935 = vsel %vm282, %v932, 0
    %937 = vmatpush.bf16.msra.mxu0 0
    %938 = vmatpush.bf16.msra.mxu0 0
    %939 = vmatpush.bf16.msra.mxu0 0
    %940 = vmatpush.bf16.msra.mxu0 0
    %941 = vmatpush.bf16.msra.mxu0 0
    %942 = vmatpush.bf16.msra.mxu0 0
    %943 = vmatpush.bf16.msra.mxu0 0
    %944 = vmatpush.bf16.msra.mxu0 %v933
    %945 = vmatmul.bf16.gmra.mxu0 %v935
    %v946 = vpop.f32.mrf.mxu0
    %v947 = vadd.f32 0.0, %v946
    %v948 = vpop.f32.mrf.mxu0
    %v949 = vadd.f32 0.0, %v948
    %950 = vdwg.mxu0
    %v952 = vsel %vm282, %v858, 0
    %954 = vmatpush.bf16.msra.mxu0 0
    %955 = vmatpush.bf16.msra.mxu0 0
    %956 = vmatpush.bf16.msra.mxu0 0
    %957 = vmatpush.bf16.msra.mxu0 0
    %958 = vmatpush.bf16.msra.mxu0 0
    %959 = vmatpush.bf16.msra.mxu0 0
    %960 = vmatpush.bf16.msra.mxu0 0
    %961 = vmatpush.bf16.msra.mxu0 %v859
    %962 = vmatmul.bf16.gmra.mxu0 %v952
    %v963 = vpop.f32.mrf.mxu0
    %v964 = vadd.f32 %v947, %v963
    %v965 = vpop.f32.mrf.mxu0
    %v966 = vadd.f32 %v949, %v965
    %967 = vdwg.mxu0
    %v968 = vperm.slane %v74, 7
    %v969 = vadd.f32 %v964, %v968
    %v970 = vadd.f32 %v966, %v968
    %v971 = vadd.f32 %v969, %v730
    %v972 = vadd.f32 %v970, %v731
    %v973 = vsel %vm134, %v971, 0.0
    %974 = vadd.xlane.f32.xlu0 %v973
    %v975 = vpop.xlane.xlu0 %974
    %v976 = vsel %vm134, %v972, 0.0
    %977 = vadd.xlane.f32.xlu0 %v976
    %v978 = vpop.xlane.xlu0 %977
    %v979 = vmul.f32 %v975, %v147
    %v980 = vmul.f32 %v978, %v147
    %v981 = vsub.f32 %v971, %v979
    %v982 = vsub.f32 %v972, %v980
    %v983 = vmul.f32 %v981, %v981
    %v984 = vmul.f32 %v982, %v982
    %v985 = vsel %vm134, %v983, 0.0
    %986 = vadd.xlane.f32.xlu0 %v985
    %v987 = vpop.xlane.xlu0 %986
    %v988 = vsel %vm134, %v984, 0.0
    %989 = vadd.xlane.f32.xlu0 %v988
    %v990 = vpop.xlane.xlu0 %989
    %v991 = vmul.f32 %v987, %v147
    %v992 = vmul.f32 %v990, %v147
    %v993 = vadd.f32 %v991, 1e-05
    %v994 = vadd.f32 %v992, 1e-05
    %v995 = vrsqrt.pop %v993
    %v996 = vmul.f32 %v995, %v993
    %v997 = vmul.f32 %v996, %v995
    %v998 = vmul.f32 0.5, %v997
    %v999 = vsub.f32 1.5, %v998
    %v1000 = vmul.f32 %v995, %v999
    %vm1001 = vweird.f32 %v993
    %vm1002 = vweird.f32 %v995
    %vm1003 = vmor %vm1001, %vm1002
    %v1004 = vsel %vm1003, %v995, %v1000
    %v1005 = vrsqrt.pop %v994
    %v1006 = vmul.f32 %v1005, %v994
    %v1007 = vmul.f32 %v1006, %v1005
    %v1008 = vmul.f32 0.5, %v1007
    %v1009 = vsub.f32 1.5, %v1008
    %v1010 = vmul.f32 %v1005, %v1009
    %vm1011 = vweird.f32 %v994
    %vm1012 = vweird.f32 %v1005
    %vm1013 = vmor %vm1011, %vm1012
    %v1014 = vsel %vm1013, %v1005, %v1010
    %v1015 = vmul.f32 %v981, %v1004
    %v1016 = vmul.f32 %v982, %v1014
    %v1017 = vperm.slane %v75, 0
    %v1018 = vmul.f32 %v1015, %v1017
    %v1019 = vmul.f32 %v1016, %v1017
    %v1020 = vperm.slane %v75, 1
    %v1021 = vadd.f32 %v1018, %v1020
    %v1022 = vadd.f32 %v1019, %v1020
    %v1023 = vld [vmem:[%s16] sm:$0xff]
    %v1024 = vld [vmem:[%s16 + $0x8] sm:$0xff]
    %v1025 = vld [vmem:[%s16 + $0x10] sm:$0xff]
    %v1026 = vld [vmem:[%s16 + $0x18] sm:$0xff]
    %v1027 = vld [vmem:[%s17] sm:$0xff]
    %v1028 = vld [vmem:[%s17 + $0x8] sm:$0xff]
    %v1029 = vld [vmem:[%s17 + $0x10] sm:$0xff]
    %v1030 = vld [vmem:[%s17 + $0x18] sm:$0xff]
    %v1031 = vld [vmem:[%s18] sm:$0xff]
    %v1032 = vld [vmem:[%s18 + $0x8] sm:$0xff]
    %v1033 = vld [vmem:[%s18 + $0x10] sm:$0xff]
    %v1034 = vld [vmem:[%s18 + $0x18] sm:$0xff]
    %v1035 = vpack.c.bf16 %v1022, %v1021
    %v1036 = vpack.c.bf16 %v1024, %v1023
    %v1037 = vpack.c.bf16 %v1026, %v1025
    %v1038 = vperm.slane %v75, 2
    %v1040 = vsel %vm134, %v1035, 0
    %1042 = vmatpush.bf16.msra.mxu0 0
    %1043 = vmatpush.bf16.msra.mxu0 0
    %1044 = vmatpush.bf16.msra.mxu0 0
    %1045 = vmatpush.bf16.msra.mxu0 0
    %1046 = vmatpush.bf16.msra.mxu0 0
    %1047 = vmatpush.bf16.msra.mxu0 0
    %1048 = vmatpush.bf16.msra.mxu0 %v1037
    %1049 = vmatpush.bf16.msra.mxu0 %v1036
    %1050 = vmatmul.bf16.gmra.mxu0 %v1040
    %v1051 = vpop.f32.mrf.mxu0
    %v1052 = vadd.f32 %v1038, %v1051
    %v1053 = vpop.f32.mrf.mxu0
    %v1054 = vadd.f32 %v1038, %v1053
    %1055 = vdwg.mxu0
    %v1056 = vpack.c.bf16 %v642, %v641
    %v1057 = vpack.c.bf16 %v1028, %v1027
    %v1058 = vpack.c.bf16 %v1030, %v1029
    %v1059 = vperm.slane %v75, 3
    %v1061 = vsel %vm134, %v1056, 0
    %1063 = vmatpush.bf16.msra.mxu0 0
    %1064 = vmatpush.bf16.msra.mxu0 0
    %1065 = vmatpush.bf16.msra.mxu0 0
    %1066 = vmatpush.bf16.msra.mxu0 0
    %1067 = vmatpush.bf16.msra.mxu0 0
    %1068 = vmatpush.bf16.msra.mxu0 0
    %1069 = vmatpush.bf16.msra.mxu0 %v1058
    %1070 = vmatpush.bf16.msra.mxu0 %v1057
    %1071 = vmatmul.bf16.gmra.mxu0 %v1061
    %v1072 = vpop.f32.mrf.mxu0
    %v1073 = vadd.f32 %v1059, %v1072
    %v1074 = vpop.f32.mrf.mxu0
    %v1075 = vadd.f32 %v1059, %v1074
    %1076 = vdwg.mxu0
    %v1077 = vpack.c.bf16 %v1054, %v1052
    %v1078 = vpack.c.bf16 %v1075, %v1073
    %v1080 = vsel %vm282, %v1077, 0
    %v1083 = vsel %vm282, %v1078, 0
    %1085 = vmatpush.bf16.xpose.msra.mxu0 0
    %1086 = vmatpush.bf16.xpose.msra.mxu0 0
    %1087 = vmatpush.bf16.xpose.msra.mxu0 0
    %1088 = vmatpush.bf16.xpose.msra.mxu0 0
    %1089 = vmatpush.bf16.xpose.msra.mxu0 0
    %1090 = vmatpush.bf16.xpose.msra.mxu0 0
    %1091 = vmatpush.bf16.xpose.msra.mxu0 0
    %1092 = vmatpush.bf16.xpose.msra.mxu0 %v1083
    %1093 = vmatmul.bf16.gmra.mxu0 %v1080
    %v1094 = vpop.f32.mrf.mxu0
    %v1095 = vadd.f32 0.0, %v1094
    %v1096 = vpop.f32.mrf.mxu0
    %v1097 = vadd.f32 0.0, %v1096
    %1098 = vdwg.mxu0
    %v1099 = vmul.f32 %v1095, 0.25
    %v1100 = vmul.f32 %v1097, 0.25
    %v1101 = vadd.f32 %v1099, %v278
    %v1102 = vadd.f32 %v1100, %v279
    %v1103 = vsel %vm282, %v1101, -inf
    %1104 = vmax.xlane.f32.xlu0 %v1103
    %v1105 = vpop.xlane.xlu0 %1104
    %v1106 = vsel %vm282, %v1102, -inf
    %1107 = vmax.xlane.f32.xlu0 %v1106
    %v1108 = vpop.xlane.xlu0 %1107
    %v1109 = vsub.f32 %v1101, %v1105
    %v1110 = vsub.f32 %v1102, %v1108
    %v1111 = vmul.f32 %v1109, 1.442695
    %v1112 = vpow.pop %v1111
    %v1113 = vmul.f32 %v1110, 1.442695
    %v1114 = vpow.pop %v1113
    %v1115 = vsel %vm282, %v1112, 0.0
    %1116 = vadd.xlane.f32.xlu0 %v1115
    %v1117 = vpop.xlane.xlu0 %1116
    %v1118 = vsel %vm282, %v1114, 0.0
    %1119 = vadd.xlane.f32.xlu0 %v1118
    %v1120 = vpop.xlane.xlu0 %1119
    %v1121 = vrcp.pop %v1117
    %v1122 = vrcp.pop %v1120
    %v1123 = vmul.f32 %v1112, %v1121
    %v1124 = vmul.f32 %v1114, %v1122
    %v1125 = vpack.c.bf16 %v1124, %v1123
    %1127 = vrot.lane.b32.xlu0 %v1078, 96
    %v1128 = vpop.permute.xlu0 %1127
    %v1131 = vsel %vm282, %v1125, 0
    %1133 = vmatpush.bf16.msra.mxu0 0
    %1134 = vmatpush.bf16.msra.mxu0 0
    %1135 = vmatpush.bf16.msra.mxu0 0
    %1136 = vmatpush.bf16.msra.mxu0 0
    %1137 = vmatpush.bf16.msra.mxu0 0
    %1138 = vmatpush.bf16.msra.mxu0 0
    %1139 = vmatpush.bf16.msra.mxu0 0
    %1140 = vmatpush.bf16.msra.mxu0 %v1128
    %1141 = vmatmul.bf16.gmra.mxu0 %v1131
    %v1142 = vpop.f32.mrf.mxu0
    %v1143 = vadd.f32 0.0, %v1142
    %v1144 = vpop.f32.mrf.mxu0
    %v1145 = vadd.f32 0.0, %v1144
    %1146 = vdwg.mxu0
    %v1147 = vpack.c.bf16 %v1145, %v1143
    %v1148 = vpack.c.bf16 %v1032, %v1031
    %1150 = vrot.lane.b32.xlu0 %v1077, 112
    %v1151 = vpop.permute.xlu0 %1150
    %1152 = vrot.lane.b32.xlu0 %v1078, 112
    %v1153 = vpop.permute.xlu0 %1152
    %v1155 = vsel %vm282, %v1151, 0
    %v1158 = vsel %vm282, %v1153, 0
    %1160 = vmatpush.bf16.xpose.msra.mxu0 0
    %1161 = vmatpush.bf16.xpose.msra.mxu0 0
    %1162 = vmatpush.bf16.xpose.msra.mxu0 0
    %1163 = vmatpush.bf16.xpose.msra.mxu0 0
    %1164 = vmatpush.bf16.xpose.msra.mxu0 0
    %1165 = vmatpush.bf16.xpose.msra.mxu0 0
    %1166 = vmatpush.bf16.xpose.msra.mxu0 0
    %1167 = vmatpush.bf16.xpose.msra.mxu0 %v1158
    %1168 = vmatmul.bf16.gmra.mxu0 %v1155
    %v1169 = vpop.f32.mrf.mxu0
    %v1170 = vadd.f32 0.0, %v1169
    %v1171 = vpop.f32.mrf.mxu0
    %v1172 = vadd.f32 0.0, %v1171
    %1173 = vdwg.mxu0
    %v1174 = vmul.f32 %v1170, 0.25
    %v1175 = vmul.f32 %v1172, 0.25
    %v1176 = vadd.f32 %v1174, %v278
    %v1177 = vadd.f32 %v1175, %v279
    %v1178 = vsel %vm282, %v1176, -inf
    %1179 = vmax.xlane.f32.xlu0 %v1178
    %v1180 = vpop.xlane.xlu0 %1179
    %v1181 = vsel %vm282, %v1177, -inf
    %1182 = vmax.xlane.f32.xlu0 %v1181
    %v1183 = vpop.xlane.xlu0 %1182
    %v1184 = vsub.f32 %v1176, %v1180
    %v1185 = vsub.f32 %v1177, %v1183
    %v1186 = vmul.f32 %v1184, 1.442695
    %v1187 = vpow.pop %v1186
    %v1188 = vmul.f32 %v1185, 1.442695
    %v1189 = vpow.pop %v1188
    %v1190 = vsel %vm282, %v1187, 0.0
    %1191 = vadd.xlane.f32.xlu0 %v1190
    %v1192 = vpop.xlane.xlu0 %1191
    %v1193 = vsel %vm282, %v1189, 0.0
    %1194 = vadd.xlane.f32.xlu0 %v1193
    %v1195 = vpop.xlane.xlu0 %1194
    %v1196 = vrcp.pop %v1192
    %v1197 = vrcp.pop %v1195
    %v1198 = vmul.f32 %v1187, %v1196
    %v1199 = vmul.f32 %v1189, %v1197
    %v1200 = vpack.c.bf16 %v1199, %v1198
    %1201 = vrot.lane.b32.xlu0 %v1078, 80
    %v1202 = vpop.permute.xlu0 %1201
    %v1205 = vsel %vm282, %v1200, 0
    %1207 = vmatpush.bf16.msra.mxu0 0
    %1208 = vmatpush.bf16.msra.mxu0 0
    %1209 = vmatpush.bf16.msra.mxu0 0
    %1210 = vmatpush.bf16.msra.mxu0 0
    %1211 = vmatpush.bf16.msra.mxu0 0
    %1212 = vmatpush.bf16.msra.mxu0 0
    %1213 = vmatpush.bf16.msra.mxu0 0
    %1214 = vmatpush.bf16.msra.mxu0 %v1202
    %1215 = vmatmul.bf16.gmra.mxu0 %v1205
    %v1216 = vpop.f32.mrf.mxu0
    %v1217 = vadd.f32 0.0, %v1216
    %v1218 = vpop.f32.mrf.mxu0
    %v1219 = vadd.f32 0.0, %v1218
    %1220 = vdwg.mxu0
    %v1221 = vpack.c.bf16 %v1219, %v1217
    %v1222 = vpack.c.bf16 %v1034, %v1033
    %v1224 = vsel %vm282, %v1221, 0
    %1226 = vmatpush.bf16.msra.mxu0 0
    %1227 = vmatpush.bf16.msra.mxu0 0
    %1228 = vmatpush.bf16.msra.mxu0 0
    %1229 = vmatpush.bf16.msra.mxu0 0
    %1230 = vmatpush.bf16.msra.mxu0 0
    %1231 = vmatpush.bf16.msra.mxu0 0
    %1232 = vmatpush.bf16.msra.mxu0 0
    %1233 = vmatpush.bf16.msra.mxu0 %v1222
    %1234 = vmatmul.bf16.gmra.mxu0 %v1224
    %v1235 = vpop.f32.mrf.mxu0
    %v1236 = vadd.f32 0.0, %v1235
    %v1237 = vpop.f32.mrf.mxu0
    %v1238 = vadd.f32 0.0, %v1237
    %1239 = vdwg.mxu0
    %v1241 = vsel %vm282, %v1147, 0
    %1243 = vmatpush.bf16.msra.mxu0 0
    %1244 = vmatpush.bf16.msra.mxu0 0
    %1245 = vmatpush.bf16.msra.mxu0 0
    %1246 = vmatpush.bf16.msra.mxu0 0
    %1247 = vmatpush.bf16.msra.mxu0 0
    %1248 = vmatpush.bf16.msra.mxu0 0
    %1249 = vmatpush.bf16.msra.mxu0 0
    %1250 = vmatpush.bf16.msra.mxu0 %v1148
    %1251 = vmatmul.bf16.gmra.mxu0 %v1241
    %v1252 = vpop.f32.mrf.mxu0
    %v1253 = vadd.f32 %v1236, %v1252
    %v1254 = vpop.f32.mrf.mxu0
    %v1255 = vadd.f32 %v1238, %v1254
    %1256 = vdwg.mxu0
    %v1257 = vperm.slane %v75, 4
    %v1258 = vadd.f32 %v1253, %v1257
    %v1259 = vadd.f32 %v1255, %v1257
    %v1260 = vadd.f32 %v1258, %v1021
    %v1261 = vadd.f32 %v1259, %v1022
    %v1262 = vsel %vm134, %v1260, 0.0
    %1263 = vadd.xlane.f32.xlu0 %v1262
    %v1264 = vpop.xlane.xlu0 %1263
    %v1265 = vsel %vm134, %v1261, 0.0
    %1266 = vadd.xlane.f32.xlu0 %v1265
    %v1267 = vpop.xlane.xlu0 %1266
    %v1268 = vmul.f32 %v1264, %v147
    %v1269 = vmul.f32 %v1267, %v147
    %v1270 = vsub.f32 %v1260, %v1268
    %v1271 = vsub.f32 %v1261, %v1269
    %v1272 = vmul.f32 %v1270, %v1270
    %v1273 = vmul.f32 %v1271, %v1271
    %v1274 = vsel %vm134, %v1272, 0.0
    %1275 = vadd.xlane.f32.xlu0 %v1274
    %v1276 = vpop.xlane.xlu0 %1275
    %v1277 = vsel %vm134, %v1273, 0.0
    %1278 = vadd.xlane.f32.xlu0 %v1277
    %v1279 = vpop.xlane.xlu0 %1278
    %v1280 = vmul.f32 %v1276, %v147
    %v1281 = vmul.f32 %v1279, %v147
    %v1282 = vadd.f32 %v1280, 1e-05
    %v1283 = vadd.f32 %v1281, 1e-05
    %v1284 = vrsqrt.pop %v1282
    %v1285 = vmul.f32 %v1284, %v1282
    %v1286 = vmul.f32 %v1285, %v1284
    %v1287 = vmul.f32 0.5, %v1286
    %v1288 = vsub.f32 1.5, %v1287
    %v1289 = vmul.f32 %v1284, %v1288
    %vm1290 = vweird.f32 %v1282
    %vm1291 = vweird.f32 %v1284
    %vm1292 = vmor %vm1290, %vm1291
    %v1293 = vsel %vm1292, %v1284, %v1289
    %v1294 = vrsqrt.pop %v1283
    %v1295 = vmul.f32 %v1294, %v1283
    %v1296 = vmul.f32 %v1295, %v1294
    %v1297 = vmul.f32 0.5, %v1296
    %v1298 = vsub.f32 1.5, %v1297
    %v1299 = vmul.f32 %v1294, %v1298
    %vm1300 = vweird.f32 %v1283
    %vm1301 = vweird.f32 %v1294
    %vm1302 = vmor %vm1300, %vm1301
    %v1303 = vsel %vm1302, %v1294, %v1299
    %v1304 = vmul.f32 %v1270, %v1293
    %v1305 = vmul.f32 %v1271, %v1303
    %v1306 = vperm.slane %v75, 5
    %v1307 = vmul.f32 %v1304, %v1306
    %v1308 = vmul.f32 %v1305, %v1306
    %v1309 = vperm.slane %v75, 6
    %v1310 = vadd.f32 %v1307, %v1309
    %v1311 = vadd.f32 %v1308, %v1309
    %v1312 = vld [vmem:[%s19] sm:$0xff]
    %v1313 = vld [vmem:[%s19 + $0x8] sm:$0xff]
    %v1314 = vld [vmem:[%s19 + $0x10] sm:$0xff]
    %v1315 = vld [vmem:[%s19 + $0x18] sm:$0xff]
    %v1316 = vld [vmem:[%s20] sm:$0xff]
    %v1317 = vld [vmem:[%s20 + $0x8] sm:$0xff]
    %v1318 = vld [vmem:[%s20 + $0x10] sm:$0xff]
    %v1319 = vld [vmem:[%s20 + $0x18] sm:$0xff]
    %v1320 = vld [vmem:[%s20 + $0x20] sm:$0xff]
    %v1321 = vld [vmem:[%s20 + $0x28] sm:$0xff]
    %v1322 = vld [vmem:[%s20 + $0x30] sm:$0xff]
    %v1323 = vld [vmem:[%s20 + $0x38] sm:$0xff]
    %v1324 = vpack.c.bf16 %v1311, %v1310
    %v1325 = vpack.c.bf16 %v1313, %v1312
    %v1326 = vpack.c.bf16 %v1315, %v1314
    %v1327 = vperm.slane %v75, 7
    %v1329 = vsel %vm134, %v1324, 0
    %1331 = vmatpush.bf16.msra.mxu0 0
    %1332 = vmatpush.bf16.msra.mxu0 0
    %1333 = vmatpush.bf16.msra.mxu0 0
    %1334 = vmatpush.bf16.msra.mxu0 0
    %1335 = vmatpush.bf16.msra.mxu0 0
    %1336 = vmatpush.bf16.msra.mxu0 0
    %1337 = vmatpush.bf16.msra.mxu0 %v1326
    %1338 = vmatpush.bf16.msra.mxu0 %v1325
    %1339 = vmatmul.bf16.gmra.mxu0 %v1329
    %v1340 = vpop.f32.mrf.mxu0
    %v1341 = vadd.f32 %v1327, %v1340
    %v1342 = vpop.f32.mrf.mxu0
    %v1343 = vadd.f32 %v1327, %v1342
    %1344 = vdwg.mxu0
    %v1345 = vmul.f32 %v1341, %v1341
    %v1346 = vmul.f32 %v1343, %v1343
    %v1347 = vmul.f32 %v1341, %v1345
    %v1348 = vmul.f32 %v1343, %v1346
    %v1349 = vmul.f32 %v1347, 0.044715
    %v1350 = vmul.f32 %v1348, 0.044715
    %v1351 = vadd.f32 %v1341, %v1349
    %v1352 = vadd.f32 %v1343, %v1350
    %v1353 = vmul.f32 %v1351, 0.7978846
    %v1354 = vmul.f32 %v1352, 0.7978846
    %v1355 = vtanh.pop %v1353
    %v1356 = vtanh.pop %v1354
    %v1357 = vadd.f32 %v1355, 1.0
    %v1358 = vadd.f32 %v1356, 1.0
    %v1359 = vmul.f32 %v1357, 0.5
    %v1360 = vmul.f32 %v1358, 0.5
    %v1361 = vmul.f32 %v1341, %v1359
    %v1362 = vmul.f32 %v1343, %v1360
    %v1363 = vpack.c.bf16 %v1362, %v1361
    %v1364 = vpack.c.bf16 %v1317, %v1316
    %v1365 = vpack.c.bf16 %v1319, %v1318
    %v1366 = vpack.c.bf16 %v1321, %v1320
    %v1367 = vpack.c.bf16 %v1323, %v1322
    %v1368 = vperm.slane %v76, 0
    %v1370 = vsel %vm573, %v1363, 0
    %1372 = vmatpush.bf16.msra.mxu0 0
    %1373 = vmatpush.bf16.msra.mxu0 0
    %1374 = vmatpush.bf16.msra.mxu0 0
    %1375 = vmatpush.bf16.msra.mxu0 0
    %1376 = vmatpush.bf16.msra.mxu0 %v1367
    %1377 = vmatpush.bf16.msra.mxu0 %v1366
    %1378 = vmatpush.bf16.msra.mxu0 %v1365
    %1379 = vmatpush.bf16.msra.mxu0 %v1364
    %1380 = vmatmul.bf16.gmra.mxu0 %v1370
    %v1381 = vpop.f32.mrf.mxu0
    %v1382 = vadd.f32 %v1368, %v1381
    %v1383 = vpop.f32.mrf.mxu0
    %v1384 = vadd.f32 %v1368, %v1383
    %1385 = vdwg.mxu0
    %v1386 = vadd.f32 %v1382, %v1310
    %v1387 = vadd.f32 %v1384, %v1311
    %v1388 = vsel %vm134, %v1386, 0.0
    %1389 = vadd.xlane.f32.xlu0 %v1388
    %v1390 = vpop.xlane.xlu0 %1389
    %v1391 = vsel %vm134, %v1387, 0.0
    %1392 = vadd.xlane.f32.xlu0 %v1391
    %v1393 = vpop.xlane.xlu0 %1392
    %v1394 = vmul.f32 %v1390, %v147
    %v1395 = vmul.f32 %v1393, %v147
    %v1396 = vsub.f32 %v1386, %v1394
    %v1397 = vsub.f32 %v1387, %v1395
    %v1398 = vmul.f32 %v1396, %v1396
    %v1399 = vmul.f32 %v1397, %v1397
    %v1400 = vsel %vm134, %v1398, 0.0
    %1401 = vadd.xlane.f32.xlu0 %v1400
    %v1402 = vpop.xlane.xlu0 %1401
    %v1403 = vsel %vm134, %v1399, 0.0
    %1404 = vadd.xlane.f32.xlu0 %v1403
    %v1405 = vpop.xlane.xlu0 %1404
    %v1406 = vmul.f32 %v1402, %v147
    %v1407 = vmul.f32 %v1405, %v147
    %v1408 = vadd.f32 %v1406, 1e-05
    %v1409 = vadd.f32 %v1407, 1e-05
    %v1410 = vrsqrt.pop %v1408
    %v1411 = vmul.f32 %v1410, %v1408
    %v1412 = vmul.f32 %v1411, %v1410
    %v1413 = vmul.f32 0.5, %v1412
    %v1414 = vsub.f32 1.5, %v1413
    %v1415 = vmul.f32 %v1410, %v1414
    %vm1416 = vweird.f32 %v1408
    %vm1417 = vweird.f32 %v1410
    %vm1418 = vmor %vm1416, %vm1417
    %v1419 = vsel %vm1418, %v1410, %v1415
    %v1420 = vrsqrt.pop %v1409
    %v1421 = vmul.f32 %v1420, %v1409
    %v1422 = vmul.f32 %v1421, %v1420
    %v1423 = vmul.f32 0.5, %v1422
    %v1424 = vsub.f32 1.5, %v1423
    %v1425 = vmul.f32 %v1420, %v1424
    %vm1426 = vweird.f32 %v1409
    %vm1427 = vweird.f32 %v1420
    %vm1428 = vmor %vm1426, %vm1427
    %v1429 = vsel %vm1428, %v1420, %v1425
    %v1430 = vmul.f32 %v1396, %v1419
    %v1431 = vmul.f32 %v1397, %v1429
    %v1432 = vperm.slane %v76, 1
    %v1433 = vmul.f32 %v1430, %v1432
    %v1434 = vmul.f32 %v1431, %v1432
    %v1435 = vperm.slane %v76, 2
    %v1436 = vadd.f32 %v1433, %v1435
    %v1437 = vadd.f32 %v1434, %v1435
    %v1438 = vpack.c.bf16 %v1437, %v1436
    %v1439 = vpack.c.bf16 %v78, %v77
    %v1440 = vpack.c.bf16 %v80, %v79
    %v1441 = vpack.c.bf16 %v82, %v81
    %v1442 = vpack.c.bf16 %v84, %v83
    %v1443 = vpack.c.bf16 %v86, %v85
    %v1444 = vpack.c.bf16 %v88, %v87
    %v1445 = vpack.c.bf16 %v90, %v89
    %v1446 = vpack.c.bf16 %v92, %v91
    %v1447 = vperm.slane %v76, 3
    %v1449 = vsel %vm134, %v1438, 0
    %v1452 = vsel %vm134, %v1439, 0
    %v1455 = vsel %vm134, %v1440, 0
    %v1458 = vsel %vm134, %v1441, 0
    %v1461 = vsel %vm134, %v1442, 0
    %v1464 = vsel %vm134, %v1443, 0
    %v1467 = vsel %vm134, %v1444, 0
    %v1470 = vsel %vm134, %v1445, 0
    %v1473 = vsel %vm134, %v1446, 0
    %1475 = vmatpush.bf16.xpose.msra.mxu0 %v1473
    %1476 = vmatpush.bf16.xpose.msra.mxu0 %v1470
    %1477 = vmatpush.bf16.xpose.msra.mxu0 %v1467
    %1478 = vmatpush.bf16.xpose.msra.mxu0 %v1464
    %1479 = vmatpush.bf16.xpose.msra.mxu0 %v1461
    %1480 = vmatpush.bf16.xpose.msra.mxu0 %v1458
    %1481 = vmatpush.bf16.xpose.msra.mxu0 %v1455
    %1482 = vmatpush.bf16.xpose.msra.mxu0 %v1452
    %1483 = vmatmul.bf16.gmra.mxu0 %v1449
    %v1484 = vpop.f32.mrf.mxu0
    %v1485 = vadd.f32 %v1447, %v1484
    %v1486 = vpop.f32.mrf.mxu0
    %v1487 = vadd.f32 %v1447, %v1486
    %1488 = vdwg.mxu0
    %1489 = vst [vmem:[#allocation2] sm:$0xff] %v1485
    %1490 = vst [vmem:[#allocation2 + $0x8] sm:$0xff] %v1487
    %v1491 = vld [vmem:[%s2] sm:$0xff]
    %v1492 = vld [vmem:[%s2 + $0x8] sm:$0xff]
    %1493 = vmax.xlane.f32.xlu0 %v1485
    %v1494 = vpop.xlane.xlu0 %1493
    %1495 = vmax.xlane.f32.xlu0 %v1487
    %v1496 = vpop.xlane.xlu0 %1495
    %v1497 = vsub.f32 %v1485, %v1494
    %v1498 = vsub.f32 %v1487, %v1496
    %v1499 = vmul.f32 %v1497, 1.442695
    %v1500 = vpow.pop %v1499
    %v1501 = vmul.f32 %v1498, 1.442695
    %v1502 = vpow.pop %v1501
    %1503 = vadd.xlane.f32.xlu0 %v1500
    %v1504 = vpop.xlane.xlu0 %1503
    %1505 = vadd.xlane.f32.xlu0 %v1502
    %v1506 = vpop.xlane.xlu0 %1505
    %v1507 = vlog2.pop %v1504
    %v1508 = vmul.f32 %v1507, 0.6931472
    %v1509 = vlog2.pop %v1506
    %v1510 = vmul.f32 %v1509, 0.6931472
    %v1511 = vadd.f32 %v1494, %v1508
    %v1512 = vadd.f32 %v1496, %v1510
    %1513 = vset.pattern.permute.xlu0 0
    %1514 = vperm.xlu0 %1513, %v1491
    %v1515 = vpop.permute.xlu0 %1514
    %1516 = vset.pattern.permute.xlu0 0
    %1517 = vperm.xlu0 %1516, %v1492
    %v1518 = vpop.permute.xlu0 %1517
    %vm1519 = vcmp.eq.s32.totalorder %v98, %v1515
    %vm1520 = vcmp.eq.s32.totalorder %v98, %v1518
    %v1521 = vsel %vm1519, %v1485, 0.0
    %v1522 = vsel %vm1520, %v1487, 0.0
    %1523 = vadd.xlane.f32.xlu0 %v1521
    %v1524 = vpop.xlane.xlu0 %1523
    %1525 = vadd.xlane.f32.xlu0 %v1522
    %v1526 = vpop.xlane.xlu0 %1525
    %vm1527 = vcmp.ne.s32.totalorder %v1491, 4294967196
    %vm1528 = vcmp.ne.s32.totalorder %v1492, 4294967196
    %v1529 = vsub.f32 %v1511, %v1524
    %v1530 = vsub.f32 %v1512, %v1526
    %v1531 = vsel %vm1527, %v1529, 0.0
    %v1532 = vsel %vm1528, %v1530, 0.0
    %v1533 = vsel %vm1527, 1, 0
    %v1534 = vsel %vm1528, 1, 0
    %v1535 = vcvt.s32.f32 %v1533
    %v1536 = vcvt.s32.f32 %v1534
    %vm1537 = vcmask 7168
    %v1538 = vsel %vm1537, %v1535, 0.0
    %v1539 = vsel %vm1537, %v1536, 0.0
    %v1540 = vadd.f32 %v1538, %v1539
    %1541 = vadd.xlane.f32.xlu0 %v1540
    %v1542 = vpop.xlane.xlu0 %1541
    %v1543 = vrot.slane %v1542, 4
    %v1544 = vadd.f32 %v1542, %v1543
    %v1545 = vrot.slane %v1544, 2
    %v1546 = vadd.f32 %v1544, %v1545
    %v1547 = vrot.slane %v1546, 1
    %v1548 = vadd.f32 %v1546, %v1547
    %s1549 = vtos %v1548
    %v1550 = vsel %vm1537, %v1531, 0.0
    %v1551 = vsel %vm1537, %v1532, 0.0
    %v1552 = vadd.f32 %v1550, %v1551
    %1553 = vadd.xlane.f32.xlu0 %v1552
    %v1554 = vpop.xlane.xlu0 %1553
    %v1555 = vrot.slane %v1554, 4
    %v1556 = vadd.f32 %v1554, %v1555
    %v1557 = vrot.slane %v1556, 2
    %v1558 = vadd.f32 %v1556, %v1557
    %v1559 = vrot.slane %v1558, 1
    %v1560 = vadd.f32 %v1558, %v1559
    %s1561 = vtos %v1560
    %v1562 = vstv %s1561
    %s1563 = smax.f32 %s1549, 1.0
    %v1564 = vstv %s1563
    %v1565 = vrcp.pop %v1564
    %v1566 = vmul.f32 %v1564, %v1565
    %v1567 = vsub.f32 1.0, %v1566
    %v1568 = vmul.f32 %v1565, %v1567
    %v1569 = vadd.f32 %v1565, %v1568
    %vm1570 = vweird.f32 %v1564
    %vm1571 = vweird.f32 %v1565
    %vm1572 = vmor %vm1570, %vm1571
    %v1573 = vsel %vm1572, %v1565, %v1569
    %v1574 = vand.u32 2147483647, %v1564
    %vm1575 = vcmp.eq.f32.partialorder %v1574, 8.507059e+37
    %v1576 = vand.u32 %v1564, 2147483648
    %v1577 = vor.u32 1.1754944e-38, %v1576
    %v1578 = vsel %vm1575, %v1577, %v1573
    %v1579 = vmul.f32 %v1562, %v1578
    %vm1580 = vcmask 0
    %1581 = vst.msk [vmem:[#allocation4] sm:$0x1] %vm1580, %v1579
    // Predicated region
    $region86: #{music_bart_forward.1} parent=1 // pred_check
      _
    $region87: #{music_bart_forward.1} parent=1 // pred_check_branch
      %1583 = sbr.rel (0) target = $region89
    $region88: #{music_bart_forward.1} parent=1 // pred_region
      %1585 = vsyncadd [#allocation3], 0
      %s1586 = sshll.u32 [#allocation2], 4
      %s1587 = int_to_ptr.vmem [resolvable:$true] %s1586
      %s1588 = sshll.u32 %s21, 4
      %s1589 = int_to_ptr.hbm [resolvable:$true] %s1588
      %1594 = dma.vmem_to_hbm [thread:$0]  %s1587, 256, %s1589, [#allocation3], 128, 128, 8
    $region89: #{music_bart_forward.1} parent=1 // pred_fallthru
      _
    // Predicated region
    $region90: #{music_bart_forward.1} parent=1 // pred_check
      _
    $region91: #{music_bart_forward.1} parent=1 // pred_check_branch
      %1596 = sbr.rel (0) target = $region93
    $region92: #{music_bart_forward.1} parent=1 // pred_region
      %1598 = vsyncadd [#allocation5], 0
      %s1600 = sshll.u32 [#allocation4], 4
      %s1601 = int_to_ptr.vmem [resolvable:$true] %s1600
      %s1602 = sshll.u32 %s22, 4
      %s1603 = int_to_ptr.hbm [resolvable:$true] %s1602
      %1605 = dma.vmem_to_hbm [thread:$0]  %s1601, 16, %s1603, [#allocation5]
    $region93: #{music_bart_forward.1} parent=1 // pred_fallthru
      _
    // Predicated region
    $region94: #{music_bart_forward.1} parent=1 // pred_check
      _
    $region95: #{music_bart_forward.1} parent=1 // pred_check_branch
      %1607 = sbr.rel (0) target = $region97
    $region96: #{music_bart_forward.1} parent=1 // pred_region
      %1609 = dma.done [#allocation3], 256
    $region97: #{music_bart_forward.1} parent=1 // pred_fallthru
      _
    // Predicated region
    $region98: #{music_bart_forward.1} parent=1 // pred_check
      _
    $region99: #{music_bart_forward.1} parent=1 // pred_check_branch
      %1611 = sbr.rel (0) target = $region101
    $region100: #{music_bart_forward.1} parent=1 // pred_region
      %1613 = dma.done [#allocation5], 16
    $region101: #{music_bart_forward.1} parent=1 // pred_fallthru
      _
    %1614 = vsyncpa [#allocation3], 1
    %1615 = vsyncpa [#allocation5], 1

</llo_original>
